<compile_context>
chip_gen: v6e
topology: v6e:2x2x1
jax: 0.10.0
libtpu: 0.0.40
codegen_flags: <defaults>
</compile_context>

<pallas_src>
import functools

import jax
import jax.numpy as jnp
from jax.experimental import pallas as pl
from jax.experimental.pallas import tpu as pltpu

_LANE = 128
_SUBLANE = 8


def _round_up(v, m):
    return -(-v // m) * m


# ----------------------------------------------------------------------------
# Fused kernel: chain of (matmul + bias [+ relu]) for all layers, one batch tile.
# refs = (x_ref, w1_ref, b1_ref, w2_ref, b2_ref, ..., o_ref)
# ----------------------------------------------------------------------------
def _mlp_fused_kernel(*refs, num_layers):
    x_ref, o_ref = refs[0], refs[-1]
    w0_ref = refs[1]
    # Cast the f32 input tile to the MXU compute dtype inside the kernel — a
    # wrapper-side cast would be an extra full HBM round trip of x per call.
    h = x_ref[...].astype(w0_ref.dtype)
    for i in range(num_layers):
        w_ref = refs[1 + 2 * i]                  # (K_i, N_i)  bf16, VMEM-resident
        b_ref = refs[2 + 2 * i]                  # (1,  N_i)   f32
        y = jnp.dot(h, w_ref[...], preferred_element_type=jnp.float32)
        y = y + b_ref[...]                       # f32 epilogue
        if i < num_layers - 1:
            y = jnp.maximum(y, 0.0)              # relu in f32
            h = y.astype(w_ref.dtype)            # bf16 feed to next MXU pass
        else:
            o_ref[...] = y.astype(o_ref.dtype)


# ----------------------------------------------------------------------------
# One-time parameter packing (hoisted out of the forward path).
# ----------------------------------------------------------------------------
def prepare_mlp_params(params, compute_dtype=jnp.bfloat16):
    """Pad + cast (w, b) pairs for the fused kernel. Call ONCE at init.

    * weights pre-cast to `compute_dtype` (bf16 MXU inputs),
    * hidden (intermediate-only) widths zero-padded to multiples of 128 so
      every in-kernel activation is lane-dense; padded weight cols / bias
      entries are exactly zero, so relu keeps padding at zero,
    * first-layer K stays at the true input_dim (x is never feature-padded),
      last-layer N stays at the true output width (no padded output columns).
    """
    n = len(params)
    prepared = []
    k_dim = params[0][0].shape[0]
    for i, (w, b) in enumerate(params):
        din, dout = w.shape
        n_dim = dout if i == n - 1 else _round_up(dout, _LANE)
        w_p = jnp.zeros((k_dim, n_dim), compute_dtype).at[:din, :dout].set(
            w.astype(compute_dtype))
        b_p = jnp.zeros((1, n_dim), jnp.float32).at[0, :dout].set(
            b.astype(jnp.float32))
        prepared.append((w_p, b_p))
        k_dim = n_dim
    return prepared


# ----------------------------------------------------------------------------
# Tiling / VMEM helpers.
# ----------------------------------------------------------------------------
def _pick_batch_tile(batch, tile_b, min_tiles=2):
    tb = min(tile_b, _round_up(batch, _SUBLANE))
    # Keep >= min_tiles grid steps when the batch allows it so the "parallel"
    # batch axis can actually shard across v7x's two TensorCores.
    if pl.cdiv(batch, tb) < min_tiles and batch >= min_tiles * 2 * _SUBLANE:
        tb = _round_up(pl.cdiv(batch, min_tiles), _SUBLANE)
    return tb


def _vmem_limit_bytes(tb, din, dlast, prepared):
    act_w = max(w.shape[1] for (w, _) in prepared)
    est = (
        tb * din * 4 * 2                    # f32 input tile, double-buffered
        + tb * dlast * 4 * 2                # f32 output tile, double-buffered
        + tb * act_w * 4 * 2                # intermediate activations (f32 + bf16)
        + 2 * sum(w.size * w.dtype.itemsize + b.size * 4 for (w, b) in prepared)
    )
    # Generous slack for compiler scratch; clamp below v7x's 64 MiB physical VMEM.
    return int(min(max(2 * est + (8 << 20), 32 << 20), 56 << 20))


def _param_spec(shape, single_buffer):
    index_map = lambda i: (0,) * len(shape)   # constant: DMA'd once, resident
    if single_buffer:
        try:
            # Constant-index params never change -> single buffer halves their
            # VMEM footprint (matters most on v7x's 64 MiB VMEM).
            return pl.BlockSpec(shape, index_map, pipeline_mode=pl.Buffered(1))
        except (TypeError, AttributeError):
            pass
    return pl.BlockSpec(shape, index_map)


# ----------------------------------------------------------------------------
# Forward wrapper.
# ----------------------------------------------------------------------------
def _mlp_forward_impl(x, prepared, *, tile_b, out_dtype, single_buffer_params):
    batch, din = x.shape
    num_layers = len(prepared)
    dlast = prepared[-1][0].shape[1]

    tb = _pick_batch_tile(batch, tile_b)
    grid = (pl.cdiv(batch, tb),)   # ragged last tile: OOB rows masked, no padded x copy

    in_specs = [pl.BlockSpec((tb, din), lambda i: (i, 0))]
    flat_inputs = [x]
    for (w_p, b_p) in prepared:
        in_specs.append(_param_spec(w_p.shape, single_buffer_params))
        in_specs.append(_param_spec(b_p.shape, single_buffer_params))
        flat_inputs += [w_p, b_p]

    out_spec = pl.BlockSpec((tb, dlast), lambda i: (i, 0))
    kernel = functools.partial(_mlp_fused_kernel, num_layers=num_layers)

    return pl.pallas_call(
        kernel,
        out_shape=jax.ShapeDtypeStruct((batch, dlast), out_dtype),
        grid_spec=pl.GridSpec(grid=grid, in_specs=in_specs, out_specs=out_spec),
        compiler_params=pltpu.CompilerParams(
            dimension_semantics=("parallel",),        # batch tiles across TCs (v7x)
            vmem_limit_bytes=_vmem_limit_bytes(tb, din, dlast, prepared),
        ),
    )(*flat_inputs)


def mlp_forward(x, prepared_params, *, tile_b=512, out_dtype=jnp.float32):
    """Fused MLP forward.

    x: (B, Din) f32.  prepared_params: output of prepare_mlp_params().
    out_dtype can be set to bf16 if the consumer accepts it (halves writeback).
    """
    try:
        return _mlp_forward_impl(x, prepared_params, tile_b=tile_b,
                                 out_dtype=out_dtype, single_buffer_params=True)
    except Exception:
        # Fall back if this jax build rejects pipeline_mode=pl.Buffered(1).
        return _mlp_forward_impl(x, prepared_params, tile_b=tile_b,
                                 out_dtype=out_dtype, single_buffer_params=False)


# ----------------------------------------------------------------------------
# Parameter init (matches the torch module's Linear shapes; weights stored
# pre-transposed as (Din, Dout) so the kernel computes x @ W + b directly).
# ----------------------------------------------------------------------------
def init_mlp_params(key, input_dim, dimensions):
    dims = [input_dim] + list(dimensions)
    params = []
    for din, dout in zip(dims[:-1], dims[1:]):
        kw, kb, key = jax.random.split(key, 3)
        bound = 1.0 / jnp.sqrt(jnp.float32(din))
        w = jax.random.uniform(kw, (din, dout), jnp.float32, -bound, bound)
        b = jax.random.uniform(kb, (dout,), jnp.float32, -bound, bound)
        params.append((w, b))
    return params


# Reference mirroring the kernel's numerics (bf16 MXU inputs, f32 accumulate).
def mlp_reference(x, params, compute_dtype=jnp.bfloat16):
    n = len(params)
    h = x.astype(compute_dtype)
    y = None
    for i, (w, b) in enumerate(params):
        y = jnp.dot(h, w.astype(compute_dtype),
                    preferred_element_type=jnp.float32) + b
        if i < n - 1:
            y = jnp.maximum(y, 0.0)
            h = y.astype(compute_dtype)
    return y


if __name__ == "__main__":
    key = jax.random.PRNGKey(0)
    kx, kp = jax.random.split(key)

    batch = 200                 # non-multiple of 8/128 -> exercises ragged last tile
    input_dim = 32
    dimensions = [64, 48, 16]

    x = jax.random.normal(kx, (batch, input_dim), jnp.float32)
    params = init_mlp_params(kp, input_dim, dimensions)
    prepared = prepare_mlp_params(params)          # one-time pad + bf16 cast

    out = jax.block_until_ready(mlp_forward(x, prepared))
    ref = jax.block_until_ready(mlp_reference(x, params))

    assert out.shape == (batch, dimensions[-1]), out.shape
    err = float(jnp.max(jnp.abs(out - ref)))
    assert jnp.allclose(out, ref, atol=2e-3, rtol=2e-3), err

    print("KERNEL_OK")
</pallas_src>

<mosaic_0001>
module attributes {stable_mosaic.version = 11 : i64} {
  func.func @_mlp_fused_kernel(%arg0: i32, %arg1: memref<104x32xf32, #tpu.memory_space<vmem>>, %arg2: memref<32x128xbf16, #tpu.memory_space<vmem>>, %arg3: memref<1x128xf32, #tpu.memory_space<vmem>>, %arg4: memref<128x128xbf16, #tpu.memory_space<vmem>>, %arg5: memref<1x128xf32, #tpu.memory_space<vmem>>, %arg6: memref<128x16xbf16, #tpu.memory_space<vmem>>, %arg7: memref<1x16xf32, #tpu.memory_space<vmem>>, %arg8: memref<104x16xf32, #tpu.memory_space<vmem>>) attributes {dimension_semantics = [#tpu.dimension_semantics<parallel>], iteration_bounds = array<i64: 2>, scalar_prefetch = 0 : i64, scratch_operands = 0 : i64, tpu.core_type = #tpu.core_type<tc>, window_params = [{transform_indices = @transform_0, window_bounds = array<i64: 104, 32>}, {pipeline_mode = #tpu.pipeline_mode<synchronous>, transform_indices = @transform_1, window_bounds = array<i64: 32, 128>}, {pipeline_mode = #tpu.pipeline_mode<synchronous>, transform_indices = @transform_2, window_bounds = array<i64: 1, 128>}, {pipeline_mode = #tpu.pipeline_mode<synchronous>, transform_indices = @transform_3, window_bounds = array<i64: 128, 128>}, {pipeline_mode = #tpu.pipeline_mode<synchronous>, transform_indices = @transform_4, window_bounds = array<i64: 1, 128>}, {pipeline_mode = #tpu.pipeline_mode<synchronous>, transform_indices = @transform_5, window_bounds = array<i64: 128, 16>}, {pipeline_mode = #tpu.pipeline_mode<synchronous>, transform_indices = @transform_6, window_bounds = array<i64: 1, 16>}, {transform_indices = @transform_7, window_bounds = array<i64: 104, 16>}]} {
    %c0 = arith.constant 0 : index
    %c0_0 = arith.constant 0 : index
    %0 = vector.load %arg1[%c0, %c0_0] : memref<104x32xf32, #tpu.memory_space<vmem>>, vector<104x32xf32>
    %1 = arith.truncf %0 : vector<104x32xf32> to vector<104x32xbf16>
    %c0_1 = arith.constant 0 : index
    %c0_2 = arith.constant 0 : index
    %2 = vector.load %arg2[%c0_1, %c0_2] : memref<32x128xbf16, #tpu.memory_space<vmem>>, vector<32x128xbf16>
    %cst = arith.constant dense<0.000000e+00> : vector<104x128xf32>
    %3 = tpu.matmul %1, %2, %cst {dimension_numbers = #tpu.dot_dimension_numbers<[1], [0], [0], [1], [0, 0, 1, 1], [], []>} : vector<104x32xbf16>, vector<32x128xbf16>, vector<104x128xf32> -> vector<104x128xf32>
    %c0_3 = arith.constant 0 : index
    %c0_4 = arith.constant 0 : index
    %4 = vector.load %arg3[%c0_3, %c0_4] : memref<1x128xf32, #tpu.memory_space<vmem>>, vector<1x128xf32>
    %5 = vector.broadcast %4 : vector<1x128xf32> to vector<104x128xf32>
    %6 = arith.addf %3, %5 : vector<104x128xf32>
    %cst_5 = arith.constant 0.000000e+00 : f32
    %7 = vector.broadcast %cst_5 : f32 to vector<104x128xf32>
    %8 = arith.maximumf %6, %7 : vector<104x128xf32>
    %9 = arith.truncf %8 : vector<104x128xf32> to vector<104x128xbf16>
    %c0_6 = arith.constant 0 : index
    %c0_7 = arith.constant 0 : index
    %10 = vector.load %arg4[%c0_6, %c0_7] : memref<128x128xbf16, #tpu.memory_space<vmem>>, vector<128x128xbf16>
    %cst_8 = arith.constant dense<0.000000e+00> : vector<104x128xf32>
    %11 = tpu.matmul %9, %10, %cst_8 {dimension_numbers = #tpu.dot_dimension_numbers<[1], [0], [0], [1], [0, 0, 1, 1], [], []>} : vector<104x128xbf16>, vector<128x128xbf16>, vector<104x128xf32> -> vector<104x128xf32>
    %c0_9 = arith.constant 0 : index
    %c0_10 = arith.constant 0 : index
    %12 = vector.load %arg5[%c0_9, %c0_10] : memref<1x128xf32, #tpu.memory_space<vmem>>, vector<1x128xf32>
    %13 = vector.broadcast %12 : vector<1x128xf32> to vector<104x128xf32>
    %14 = arith.addf %11, %13 : vector<104x128xf32>
    %cst_11 = arith.constant 0.000000e+00 : f32
    %15 = vector.broadcast %cst_11 : f32 to vector<104x128xf32>
    %16 = arith.maximumf %14, %15 : vector<104x128xf32>
    %17 = arith.truncf %16 : vector<104x128xf32> to vector<104x128xbf16>
    %c0_12 = arith.constant 0 : index
    %c0_13 = arith.constant 0 : index
    %18 = vector.load %arg6[%c0_12, %c0_13] : memref<128x16xbf16, #tpu.memory_space<vmem>>, vector<128x16xbf16>
    %cst_14 = arith.constant dense<0.000000e+00> : vector<104x16xf32>
    %19 = tpu.matmul %17, %18, %cst_14 {dimension_numbers = #tpu.dot_dimension_numbers<[1], [0], [0], [1], [0, 0, 1, 1], [], []>} : vector<104x128xbf16>, vector<128x16xbf16>, vector<104x16xf32> -> vector<104x16xf32>
    %c0_15 = arith.constant 0 : index
    %c0_16 = arith.constant 0 : index
    %20 = vector.load %arg7[%c0_15, %c0_16] : memref<1x16xf32, #tpu.memory_space<vmem>>, vector<1x16xf32>
    %21 = vector.broadcast %20 : vector<1x16xf32> to vector<104x16xf32>
    %22 = arith.addf %19, %21 : vector<104x16xf32>
    %c0_17 = arith.constant 0 : index
    %c0_18 = arith.constant 0 : index
    %23 = vector.load %arg8[%c0_17, %c0_18] : memref<104x16xf32, #tpu.memory_space<vmem>>, vector<104x16xf32>
    tpu.vector_store %arg8[%c0_17, %c0_18], %22 {strides = array<i32>} : memref<104x16xf32, #tpu.memory_space<vmem>>, vector<104x16xf32>,
    return
  }
  func.func @transform_0(%arg0: i32) -> (i32, i32) {
    %c0_i32 = arith.constant 0 : i32
    %c0_i32_0 = arith.constant 0 : i32
    return %arg0, %c0_i32 : i32, i32
  }
  func.func @transform_1(%arg0: i32) -> (i32, i32) {
    %c0_i32 = arith.constant 0 : i32
    %c0_i32_0 = arith.constant 0 : i32
    %c0_i32_1 = arith.constant 0 : i32
    return %c0_i32, %c0_i32_0 : i32, i32
  }
  func.func @transform_2(%arg0: i32) -> (i32, i32) {
    %c0_i32 = arith.constant 0 : i32
    %c0_i32_0 = arith.constant 0 : i32
    %c0_i32_1 = arith.constant 0 : i32
    return %c0_i32, %c0_i32_0 : i32, i32
  }
  func.func @transform_3(%arg0: i32) -> (i32, i32) {
    %c0_i32 = arith.constant 0 : i32
    %c0_i32_0 = arith.constant 0 : i32
    %c0_i32_1 = arith.constant 0 : i32
    return %c0_i32, %c0_i32_0 : i32, i32
  }
  func.func @transform_4(%arg0: i32) -> (i32, i32) {
    %c0_i32 = arith.constant 0 : i32
    %c0_i32_0 = arith.constant 0 : i32
    %c0_i32_1 = arith.constant 0 : i32
    return %c0_i32, %c0_i32_0 : i32, i32
  }
  func.func @transform_5(%arg0: i32) -> (i32, i32) {
    %c0_i32 = arith.constant 0 : i32
    %c0_i32_0 = arith.constant 0 : i32
    %c0_i32_1 = arith.constant 0 : i32
    return %c0_i32, %c0_i32_0 : i32, i32
  }
  func.func @transform_6(%arg0: i32) -> (i32, i32) {
    %c0_i32 = arith.constant 0 : i32
    %c0_i32_0 = arith.constant 0 : i32
    %c0_i32_1 = arith.constant 0 : i32
    return %c0_i32, %c0_i32_0 : i32, i32
  }
  func.func @transform_7(%arg0: i32) -> (i32, i32) {
    %c0_i32 = arith.constant 0 : i32
    %c0_i32_0 = arith.constant 0 : i32
    return %arg0, %c0_i32 : i32, i32
  }
}

module attributes {stable_mosaic.version = 11 : i64} {
  func.func @_mlp_fused_kernel(%arg0: i32, %arg1: memref<104x32xf32, #tpu.memory_space<vmem>>, %arg2: memref<32x128xbf16, #tpu.memory_space<vmem>>, %arg3: memref<1x128xf32, #tpu.memory_space<vmem>>, %arg4: memref<128x128xbf16, #tpu.memory_space<vmem>>, %arg5: memref<1x128xf32, #tpu.memory_space<vmem>>, %arg6: memref<128x16xbf16, #tpu.memory_space<vmem>>, %arg7: memref<1x16xf32, #tpu.memory_space<vmem>>, %arg8: memref<104x16xf32, #tpu.memory_space<vmem>>) attributes {dimension_semantics = [#tpu.dimension_semantics<parallel>], iteration_bounds = array<i64: 2>, scalar_prefetch = 0 : i64, scratch_operands = 0 : i64, tpu.core_type = #tpu.core_type<tc>, window_params = [{transform_indices = @transform_0, window_bounds = array<i64: 104, 32>}, {pipeline_mode = #tpu.pipeline_mode<synchronous>, transform_indices = @transform_1, window_bounds = array<i64: 32, 128>}, {pipeline_mode = #tpu.pipeline_mode<synchronous>, transform_indices = @transform_2, window_bounds = array<i64: 1, 128>}, {pipeline_mode = #tpu.pipeline_mode<synchronous>, transform_indices = @transform_3, window_bounds = array<i64: 128, 128>}, {pipeline_mode = #tpu.pipeline_mode<synchronous>, transform_indices = @transform_4, window_bounds = array<i64: 1, 128>}, {pipeline_mode = #tpu.pipeline_mode<synchronous>, transform_indices = @transform_5, window_bounds = array<i64: 128, 16>}, {pipeline_mode = #tpu.pipeline_mode<synchronous>, transform_indices = @transform_6, window_bounds = array<i64: 1, 16>}, {transform_indices = @transform_7, window_bounds = array<i64: 104, 16>}]} {
    %c0 = arith.constant 0 : index
    %c0_0 = arith.constant 0 : index
    %0 = vector.load %arg1[%c0, %c0_0] : memref<104x32xf32, #tpu.memory_space<vmem>>, vector<104x32xf32>
    %1 = arith.truncf %0 : vector<104x32xf32> to vector<104x32xbf16>
    %c0_1 = arith.constant 0 : index
    %c0_2 = arith.constant 0 : index
    %2 = vector.load %arg2[%c0_1, %c0_2] : memref<32x128xbf16, #tpu.memory_space<vmem>>, vector<32x128xbf16>
    %cst = arith.constant dense<0.000000e+00> : vector<104x128xf32>
    %3 = tpu.matmul %1, %2, %cst {dimension_numbers = #tpu.dot_dimension_numbers<[1], [0], [0], [1], [0, 0, 1, 1], [], []>} : vector<104x32xbf16>, vector<32x128xbf16>, vector<104x128xf32> -> vector<104x128xf32>
    %c0_3 = arith.constant 0 : index
    %c0_4 = arith.constant 0 : index
    %4 = vector.load %arg3[%c0_3, %c0_4] : memref<1x128xf32, #tpu.memory_space<vmem>>, vector<1x128xf32>
    %5 = vector.broadcast %4 : vector<1x128xf32> to vector<104x128xf32>
    %6 = arith.addf %3, %5 : vector<104x128xf32>
    %cst_5 = arith.constant 0.000000e+00 : f32
    %7 = vector.broadcast %cst_5 : f32 to vector<104x128xf32>
    %8 = arith.maximumf %6, %7 : vector<104x128xf32>
    %9 = arith.truncf %8 : vector<104x128xf32> to vector<104x128xbf16>
    %c0_6 = arith.constant 0 : index
    %c0_7 = arith.constant 0 : index
    %10 = vector.load %arg4[%c0_6, %c0_7] : memref<128x128xbf16, #tpu.memory_space<vmem>>, vector<128x128xbf16>
    %cst_8 = arith.constant dense<0.000000e+00> : vector<104x128xf32>
    %11 = tpu.matmul %9, %10, %cst_8 {dimension_numbers = #tpu.dot_dimension_numbers<[1], [0], [0], [1], [0, 0, 1, 1], [], []>} : vector<104x128xbf16>, vector<128x128xbf16>, vector<104x128xf32> -> vector<104x128xf32>
    %c0_9 = arith.constant 0 : index
    %c0_10 = arith.constant 0 : index
    %12 = vector.load %arg5[%c0_9, %c0_10] : memref<1x128xf32, #tpu.memory_space<vmem>>, vector<1x128xf32>
    %13 = vector.broadcast %12 : vector<1x128xf32> to vector<104x128xf32>
    %14 = arith.addf %11, %13 : vector<104x128xf32>
    %cst_11 = arith.constant 0.000000e+00 : f32
    %15 = vector.broadcast %cst_11 : f32 to vector<104x128xf32>
    %16 = arith.maximumf %14, %15 : vector<104x128xf32>
    %17 = arith.truncf %16 : vector<104x128xf32> to vector<104x128xbf16>
    %c0_12 = arith.constant 0 : index
    %c0_13 = arith.constant 0 : index
    %18 = vector.load %arg6[%c0_12, %c0_13] : memref<128x16xbf16, #tpu.memory_space<vmem>>, vector<128x16xbf16>
    %cst_14 = arith.constant dense<0.000000e+00> : vector<104x16xf32>
    %19 = tpu.matmul %17, %18, %cst_14 {dimension_numbers = #tpu.dot_dimension_numbers<[1], [0], [0], [1], [0, 0, 1, 1], [], []>} : vector<104x128xbf16>, vector<128x16xbf16>, vector<104x16xf32> -> vector<104x16xf32>
    %c0_15 = arith.constant 0 : index
    %c0_16 = arith.constant 0 : index
    %20 = vector.load %arg7[%c0_15, %c0_16] : memref<1x16xf32, #tpu.memory_space<vmem>>, vector<1x16xf32>
    %21 = vector.broadcast %20 : vector<1x16xf32> to vector<104x16xf32>
    %22 = arith.addf %19, %21 : vector<104x16xf32>
    %c0_17 = arith.constant 0 : index
    %c0_18 = arith.constant 0 : index
    %23 = vector.load %arg8[%c0_17, %c0_18] : memref<104x16xf32, #tpu.memory_space<vmem>>, vector<104x16xf32>
    tpu.vector_store %arg8[%c0_17, %c0_18], %22 {strides = array<i32>} : memref<104x16xf32, #tpu.memory_space<vmem>>, vector<104x16xf32>,
    return
  }
  func.func @transform_0(%arg0: i32) -> (i32, i32) {
    %c0_i32 = arith.constant 0 : i32
    %c0_i32_0 = arith.constant 0 : i32
    return %arg0, %c0_i32 : i32, i32
  }
  func.func @transform_1(%arg0: i32) -> (i32, i32) {
    %c0_i32 = arith.constant 0 : i32
    %c0_i32_0 = arith.constant 0 : i32
    %c0_i32_1 = arith.constant 0 : i32
    return %c0_i32, %c0_i32_0 : i32, i32
  }
  func.func @transform_2(%arg0: i32) -> (i32, i32) {
    %c0_i32 = arith.constant 0 : i32
    %c0_i32_0 = arith.constant 0 : i32
    %c0_i32_1 = arith.constant 0 : i32
    return %c0_i32, %c0_i32_0 : i32, i32
  }
  func.func @transform_3(%arg0: i32) -> (i32, i32) {
    %c0_i32 = arith.constant 0 : i32
    %c0_i32_0 = arith.constant 0 : i32
    %c0_i32_1 = arith.constant 0 : i32
    return %c0_i32, %c0_i32_0 : i32, i32
  }
  func.func @transform_4(%arg0: i32) -> (i32, i32) {
    %c0_i32 = arith.constant 0 : i32
    %c0_i32_0 = arith.constant 0 : i32
    %c0_i32_1 = arith.constant 0 : i32
    return %c0_i32, %c0_i32_0 : i32, i32
  }
  func.func @transform_5(%arg0: i32) -> (i32, i32) {
    %c0_i32 = arith.constant 0 : i32
    %c0_i32_0 = arith.constant 0 : i32
    %c0_i32_1 = arith.constant 0 : i32
    return %c0_i32, %c0_i32_0 : i32, i32
  }
  func.func @transform_6(%arg0: i32) -> (i32, i32) {
    %c0_i32 = arith.constant 0 : i32
    %c0_i32_0 = arith.constant 0 : i32
    %c0_i32_1 = arith.constant 0 : i32
    return %c0_i32, %c0_i32_0 : i32, i32
  }
  func.func @transform_7(%arg0: i32) -> (i32, i32) {
    %c0_i32 = arith.constant 0 : i32
    %c0_i32_0 = arith.constant 0 : i32
    return %arg0, %c0_i32 : i32, i32
  }
}

</mosaic_0001>

<llo_original>
// kernel: tpu_custom_call.1
$region0: #{tpu_custom_call.1}
  #allocation0 [shape = 'u32[]', space=smem, size = 0x4, offset = 0x4, fixed_abs, tag = 'smem constant byte address 0x4 - core index']
  #allocation1 [shape = 'u32[144,128]{1,0:T(1,128)}', space=vmem, size = 0x12000, scoped, tag = 'internal scratch']
  %s0 = inlined_call_operand.vmem [shape: f32[200,32], index: 0, kind: input, shape index: {}]
  %s1 = inlined_call_operand.vmem [shape: bf16[32,128], index: 1, kind: input, shape index: {}]
  %s2 = inlined_call_operand.vmem [shape: f32[1,128], index: 2, kind: input, shape index: {}]
  %s3 = inlined_call_operand.vmem [shape: bf16[128,128], index: 3, kind: input, shape index: {}]
  %s4 = inlined_call_operand.vmem [shape: f32[1,128], index: 4, kind: input, shape index: {}]
  %s5 = inlined_call_operand.vmem [shape: bf16[128,16], index: 5, kind: input, shape index: {}]
  %s6 = inlined_call_operand.vmem [shape: f32[1,16], index: 6, kind: input, shape index: {}]
  %s7 = inlined_call_operand.vmem [shape: f32[200,16], index: 7, kind: output, shape index: {}]
  %s8 = sld [smem:[#allocation0]]
  $region109: #{tpu_custom_call.1} parent=0
    _
  %s10 = ssub.s32 1, %s8
  %s11 = scalar_select 0, %s10, %s8
  $region1: #{tpu_custom_call.1} parent=0
    #allocation2 [shape = 'u8[106496]{0}', space=vmem, size = 0x1a000, scoped, tag = 'output window, operand 0']
    loop: start=0, step=1, limit=4
    $region2: #{tpu_custom_call.1} parent=1 // loop_pre_header
      _
    $region3: #{tpu_custom_call.1} parent=1 // loop_header
      %s13 = sphi 0, %s17
      %p14 = scmp.ge.s32.totalorder %s13, 4
      %s23 = sphi 0, %s25
      %s26 = sphi 0, %s23
      %s27 = sphi 0, %s26
      %s43 = sphi 0, %s27
      %s47 = sphi 0, %s47
      %s49 = sphi 0, %s47
      %s50 = sphi 0, %s49
      %s64 = sphi 0, %s50
      %s68 = sphi 0, %s68
      %s70 = sphi 0, %s68
      %s71 = sphi 0, %s70
      %s85 = sphi 0, %s71
      %s89 = sphi 0, %s89
      %s91 = sphi 0, %s89
      %s92 = sphi 0, %s91
      %s106 = sphi 0, %s92
      %s110 = sphi 0, %s110
      %s112 = sphi 0, %s110
      %s113 = sphi 0, %s112
      %s127 = sphi 0, %s113
      %s131 = sphi 0, %s131
      %s133 = sphi 0, %s131
      %s134 = sphi 0, %s133
      %s148 = sphi 0, %s134
      %s152 = sphi 0, %s152
      %s154 = sphi 0, %s152
      %s155 = sphi 0, %s154
      %s169 = sphi 0, %s155
      %s175 = sphi 0, %s177
      %s178 = sphi 0, %s175
      %s179 = sphi 0, %s178
      %s195 = sphi 0, %s179
    $region4: #{tpu_custom_call.1} parent=1 // loop_header_branch
      %16 = sbr.rel (%p14) target = $region8
    $region5: #{tpu_custom_call.1} parent=1 // loop_body
      %s18 = ssub.s32 %s13, 1
      %s19 = ssub.s32 %s13, 2
      %s20 = sadd.s32 %s13, 1
      %s21 = ssub.s32 %s13, %s20
      %p22 = scmp.eq.s32.totalorder %s21, 0
      %s24 = sadd.s32 %s23, 1
      %s25 = scalar_select %p22, %s23, %s24
      %p28 = pneg %p22
      %p29 = scmp.eq.s32.totalorder %s13, 1
      %p30 = por %p28, %p29
      %p31 = scmp.ne.s32.totalorder %s23, %s26
      %p32 = scmp.eq.s32.totalorder %s13, 0
      %p33 = por %p31, %p32
      %p34 = scmp.ne.s32.totalorder %s23, %s26
      %p35 = scmp.eq.s32.totalorder %s18, 1
      %p36 = por %p34, %p35
      %p37 = scmp.ne.s32.totalorder %s26, %s27
      %p38 = scmp.eq.s32.totalorder %s18, 0
      %p39 = por %p37, %p38
      %p40 = scmp.ne.s32.totalorder %s26, %s27
      %p41 = scmp.eq.s32.totalorder %s19, 1
      %p42 = por %p40, %p41
      %p44 = scmp.ne.s32.totalorder %s27, %s43
      %p45 = scmp.eq.s32.totalorder %s19, 0
      %p46 = por %p44, %p45
      %s48 = sadd.s32 %s47, 1
      %p51 = scmp.eq.s32.totalorder %s13, 1
      %p52 = scmp.ne.s32.totalorder %s47, %s49
      %p53 = scmp.eq.s32.totalorder %s13, 0
      %p54 = por %p52, %p53
      %p55 = scmp.ne.s32.totalorder %s47, %s49
      %p56 = scmp.eq.s32.totalorder %s18, 1
      %p57 = por %p55, %p56
      %p58 = scmp.ne.s32.totalorder %s49, %s50
      %p59 = scmp.eq.s32.totalorder %s18, 0
      %p60 = por %p58, %p59
      %p61 = scmp.ne.s32.totalorder %s49, %s50
      %p62 = scmp.eq.s32.totalorder %s19, 1
      %p63 = por %p61, %p62
      %p65 = scmp.ne.s32.totalorder %s50, %s64
      %p66 = scmp.eq.s32.totalorder %s19, 0
      %p67 = por %p65, %p66
      %s69 = sadd.s32 %s68, 1
      %p72 = scmp.eq.s32.totalorder %s13, 1
      %p73 = scmp.ne.s32.totalorder %s68, %s70
      %p74 = scmp.eq.s32.totalorder %s13, 0
      %p75 = por %p73, %p74
      %p76 = scmp.ne.s32.totalorder %s68, %s70
      %p77 = scmp.eq.s32.totalorder %s18, 1
      %p78 = por %p76, %p77
      %p79 = scmp.ne.s32.totalorder %s70, %s71
      %p80 = scmp.eq.s32.totalorder %s18, 0
      %p81 = por %p79, %p80
      %p82 = scmp.ne.s32.totalorder %s70, %s71
      %p83 = scmp.eq.s32.totalorder %s19, 1
      %p84 = por %p82, %p83
      %p86 = scmp.ne.s32.totalorder %s71, %s85
      %p87 = scmp.eq.s32.totalorder %s19, 0
      %p88 = por %p86, %p87
      %s90 = sadd.s32 %s89, 1
      %p93 = scmp.eq.s32.totalorder %s13, 1
      %p94 = scmp.ne.s32.totalorder %s89, %s91
      %p95 = scmp.eq.s32.totalorder %s13, 0
      %p96 = por %p94, %p95
      %p97 = scmp.ne.s32.totalorder %s89, %s91
      %p98 = scmp.eq.s32.totalorder %s18, 1
      %p99 = por %p97, %p98
      %p100 = scmp.ne.s32.totalorder %s91, %s92
      %p101 = scmp.eq.s32.totalorder %s18, 0
      %p102 = por %p100, %p101
      %p103 = scmp.ne.s32.totalorder %s91, %s92
      %p104 = scmp.eq.s32.totalorder %s19, 1
      %p105 = por %p103, %p104
      %p107 = scmp.ne.s32.totalorder %s92, %s106
      %p108 = scmp.eq.s32.totalorder %s19, 0
      %p109 = por %p107, %p108
      %s111 = sadd.s32 %s110, 1
      %p114 = scmp.eq.s32.totalorder %s13, 1
      %p115 = scmp.ne.s32.totalorder %s110, %s112
      %p116 = scmp.eq.s32.totalorder %s13, 0
      %p117 = por %p115, %p116
      %p118 = scmp.ne.s32.totalorder %s110, %s112
      %p119 = scmp.eq.s32.totalorder %s18, 1
      %p120 = por %p118, %p119
      %p121 = scmp.ne.s32.totalorder %s112, %s113
      %p122 = scmp.eq.s32.totalorder %s18, 0
      %p123 = por %p121, %p122
      %p124 = scmp.ne.s32.totalorder %s112, %s113
      %p125 = scmp.eq.s32.totalorder %s19, 1
      %p126 = por %p124, %p125
      %p128 = scmp.ne.s32.totalorder %s113, %s127
      %p129 = scmp.eq.s32.totalorder %s19, 0
      %p130 = por %p128, %p129
      %s132 = sadd.s32 %s131, 1
      %p135 = scmp.eq.s32.totalorder %s13, 1
      %p136 = scmp.ne.s32.totalorder %s131, %s133
      %p137 = scmp.eq.s32.totalorder %s13, 0
      %p138 = por %p136, %p137
      %p139 = scmp.ne.s32.totalorder %s131, %s133
      %p140 = scmp.eq.s32.totalorder %s18, 1
      %p141 = por %p139, %p140
      %p142 = scmp.ne.s32.totalorder %s133, %s134
      %p143 = scmp.eq.s32.totalorder %s18, 0
      %p144 = por %p142, %p143
      %p145 = scmp.ne.s32.totalorder %s133, %s134
      %p146 = scmp.eq.s32.totalorder %s19, 1
      %p147 = por %p145, %p146
      %p149 = scmp.ne.s32.totalorder %s134, %s148
      %p150 = scmp.eq.s32.totalorder %s19, 0
      %p151 = por %p149, %p150
      %s153 = sadd.s32 %s152, 1
      %p156 = scmp.eq.s32.totalorder %s13, 1
      %p157 = scmp.ne.s32.totalorder %s152, %s154
      %p158 = scmp.eq.s32.totalorder %s13, 0
      %p159 = por %p157, %p158
      %p160 = scmp.ne.s32.totalorder %s152, %s154
      %p161 = scmp.eq.s32.totalorder %s18, 1
      %p162 = por %p160, %p161
      %p163 = scmp.ne.s32.totalorder %s154, %s155
      %p164 = scmp.eq.s32.totalorder %s18, 0
      %p165 = por %p163, %p164
      %p166 = scmp.ne.s32.totalorder %s154, %s155
      %p167 = scmp.eq.s32.totalorder %s19, 1
      %p168 = por %p166, %p167
      %p170 = scmp.ne.s32.totalorder %s155, %s169
      %p171 = scmp.eq.s32.totalorder %s19, 0
      %p172 = por %p170, %p171
      %s173 = ssub.s32 %s13, %s20
      %p174 = scmp.eq.s32.totalorder %s173, 0
      %s176 = sadd.s32 %s175, 1
      %s177 = scalar_select %p174, %s175, %s176
      %p180 = pneg %p174
      %p181 = scmp.eq.s32.totalorder %s13, 1
      %p182 = por %p180, %p181
      %p183 = scmp.ne.s32.totalorder %s175, %s178
      %p184 = scmp.eq.s32.totalorder %s13, 0
      %p185 = por %p183, %p184
      %p186 = scmp.ne.s32.totalorder %s175, %s178
      %p187 = scmp.eq.s32.totalorder %s18, 1
      %p188 = por %p186, %p187
      %p189 = scmp.ne.s32.totalorder %s178, %s179
      %p190 = scmp.eq.s32.totalorder %s18, 0
      %p191 = por %p189, %p190
      %p192 = scmp.ne.s32.totalorder %s178, %s179
      %p193 = scmp.eq.s32.totalorder %s19, 1
      %p194 = por %p192, %p193
      %p196 = scmp.ne.s32.totalorder %s179, %s195
      %p197 = scmp.eq.s32.totalorder %s19, 0
      %p198 = por %p196, %p197
      %p199 = scmp.le.s32.totalorder 1, %s13
      %p200 = scmp.lt.s32.totalorder %s13, 3
      %p201 = pnand %p199, %p200
      %p202 = pneg %p201
      // Predicated region
      $region9: #{tpu_custom_call.1} parent=5 // pred_check
        _
      $region10: #{tpu_custom_call.1} parent=5 // pred_check_branch
        %204 = sbr.rel (%p201) target = $region12
      $region11: #{tpu_custom_call.1} parent=5 // pred_region
        %s205 = ssub.s32 %s13, 1
        // Predicated region
        $region13: #{tpu_custom_call.1} parent=11 // pred_check
          %p206 = pneg %p60
        $region14: #{tpu_custom_call.1} parent=11 // pred_check_branch
          %208 = sbr.rel (%p206) target = $region16
        $region15: #{tpu_custom_call.1} parent=11 // pred_region
          _
        $region16: #{tpu_custom_call.1} parent=11 // pred_fallthru
          _
        // Predicated region
        $region17: #{tpu_custom_call.1} parent=11 // pred_check
          %p209 = pneg %p81
        $region18: #{tpu_custom_call.1} parent=11 // pred_check_branch
          %211 = sbr.rel (%p209) target = $region20
        $region19: #{tpu_custom_call.1} parent=11 // pred_region
          _
        $region20: #{tpu_custom_call.1} parent=11 // pred_fallthru
          _
        // Predicated region
        $region21: #{tpu_custom_call.1} parent=11 // pred_check
          %p212 = pneg %p102
        $region22: #{tpu_custom_call.1} parent=11 // pred_check_branch
          %214 = sbr.rel (%p212) target = $region24
        $region23: #{tpu_custom_call.1} parent=11 // pred_region
          _
        $region24: #{tpu_custom_call.1} parent=11 // pred_fallthru
          _
        // Predicated region
        $region25: #{tpu_custom_call.1} parent=11 // pred_check
          %p215 = pneg %p123
        $region26: #{tpu_custom_call.1} parent=11 // pred_check_branch
          %217 = sbr.rel (%p215) target = $region28
        $region27: #{tpu_custom_call.1} parent=11 // pred_region
          _
        $region28: #{tpu_custom_call.1} parent=11 // pred_fallthru
          _
        // Predicated region
        $region29: #{tpu_custom_call.1} parent=11 // pred_check
          %p218 = pneg %p144
        $region30: #{tpu_custom_call.1} parent=11 // pred_check_branch
          %220 = sbr.rel (%p218) target = $region32
        $region31: #{tpu_custom_call.1} parent=11 // pred_region
          _
        $region32: #{tpu_custom_call.1} parent=11 // pred_fallthru
          _
        // Predicated region
        $region33: #{tpu_custom_call.1} parent=11 // pred_check
          %p221 = pneg %p165
        $region34: #{tpu_custom_call.1} parent=11 // pred_check_branch
          %223 = sbr.rel (%p221) target = $region36
        $region35: #{tpu_custom_call.1} parent=11 // pred_region
          _
        $region36: #{tpu_custom_call.1} parent=11 // pred_fallthru
          _
      $region12: #{tpu_custom_call.1} parent=5 // pred_fallthru
        _
      %p224 = scmp.lt.s32.totalorder %s13, 2
      // Predicated region
      $region37: #{tpu_custom_call.1} parent=5 // pred_check
        %p225 = pneg %p224
      $region38: #{tpu_custom_call.1} parent=5 // pred_check_branch
        %227 = sbr.rel (%p225) target = $region40
      $region39: #{tpu_custom_call.1} parent=5 // pred_region
        // Predicated region
        $region41: #{tpu_custom_call.1} parent=39 // pred_check
          %p228 = pneg %p33
        $region42: #{tpu_custom_call.1} parent=39 // pred_check_branch
          %230 = sbr.rel (%p228) target = $region44
        $region43: #{tpu_custom_call.1} parent=39 // pred_region
          %s231 = smul.u32 13, %s13
          %s232 = ssub.s32 25, %s231
          %p233 = scmp.lt.s32.totalorder %s232, 13
          %s234 = scalar_select %p233, %s232, 13
          %s235 = smul.u32 128, %s234
          %p236 = scmp.lt.s32.totalorder %s231, 24
          %s237 = scalar_select %p236, %s231, 24
          %s238 = smul.addr %s237, 8
          %s239 = scalar_lea.vmem %s0, %s238
          %s240 = smul.u32 13, %s13
          %s241 = ssub.s32 25, %s240
          %p242 = scmp.lt.s32.totalorder %s241, 13
          %s243 = scalar_select %p242, %s241, 13
          %s244 = smul.u32 128, %s243
        $region44: #{tpu_custom_call.1} parent=39 // pred_fallthru
          _
      $region40: #{tpu_custom_call.1} parent=5 // pred_fallthru
        _
      %p245 = scmp.le.s32.totalorder 1, %s13
      %p246 = scmp.lt.s32.totalorder %s13, 3
      %p247 = pnand %p245, %p246
      %p248 = pneg %p247
      // Predicated region
      $region45: #{tpu_custom_call.1} parent=5 // pred_check
        _
      $region46: #{tpu_custom_call.1} parent=5 // pred_check_branch
        %250 = sbr.rel (%p247) target = $region48
      $region47: #{tpu_custom_call.1} parent=5 // pred_region
        %s251 = ssub.s32 %s13, 1
        %s252 = smul.u32 13, %s18
        %s253 = ssub.s32 25, %s252
        %p254 = scmp.lt.s32.totalorder %s253, 13
        %s255 = scalar_select %p254, %s253, 13
        %s256 = smul.u32 128, %s255
        %p257 = scmp.lt.s32.totalorder %s252, 24
        %s258 = scalar_select %p257, %s252, 24
        %s259 = smul.addr %s258, 8
        %s260 = scalar_lea.vmem %s0, %s259
        %p261 = pneg %p39
        %p262 = pneg %p36
        %p263 = pneg %p60
        %p264 = pneg %p57
        %p265 = pneg %p81
        %p266 = pneg %p78
        %p267 = pneg %p102
        %p268 = pneg %p99
        %p269 = pneg %p123
        %p270 = pneg %p120
        %p271 = pneg %p144
        %p272 = pneg %p141
        %p273 = pneg %p165
        %p274 = pneg %p162
        %p275 = pneg %p191
        %p276 = pneg %p188
        %s277 = sand.u32 %s178, 1
        %s278 = sand.u32 %s178, 1
        %s279 = smul.addr %s278, 104
        %s280 = scalar_lea.vmem [#allocation2], %s279
        %s281 = smul.u32 13, %s18
        %s282 = ssub.s32 25, %s281
        %p283 = scmp.lt.s32.totalorder %s282, 13
        %s284 = scalar_select %p283, %s282, 13
        %s285 = smul.u32 128, %s284
        %p286 = scmp.lt.s32.totalorder %s281, 24
        %s287 = scalar_select %p286, %s281, 24
        %s288 = smul.addr %s287, 8
        %s289 = scalar_lea.vmem %s0, %s288
        %s290 = smul.u32 13, %s18
        %s291 = ssub.s32 25, %s290
        %p292 = scmp.lt.s32.totalorder %s291, 13
        %s293 = scalar_select %p292, %s291, 13
        %s294 = smul.u32 128, %s293
        %s295 = smul.u32 13, %s18
        %s296 = ssub.s32 25, %s295
        %p297 = scmp.lt.s32.totalorder %s296, 13
        %s298 = scalar_select %p297, %s296, 13
        %s299 = smul.u32 128, %s298
        %v301 = vld [vmem:[%s289] sm:$0xff]
        %v302 = vld [vmem:[%s289 + $0x8] sm:$0xff]
        %v303 = vld [vmem:[%s289 + $0x10] sm:$0xff]
        %v304 = vld [vmem:[%s289 + $0x18] sm:$0xff]
        %v305 = vld [vmem:[%s289 + $0x20] sm:$0xff]
        %v306 = vld [vmem:[%s289 + $0x28] sm:$0xff]
        %v307 = vld [vmem:[%s289 + $0x30] sm:$0xff]
        %v308 = vld [vmem:[%s289 + $0x38] sm:$0xff]
        %v309 = vld [vmem:[%s289 + $0x40] sm:$0xff]
        %v310 = vld [vmem:[%s289 + $0x48] sm:$0xff]
        %v311 = vld [vmem:[%s289 + $0x50] sm:$0xff]
        %v312 = vld [vmem:[%s289 + $0x58] sm:$0xff]
        %v313 = vld [vmem:[%s289 + $0x60] sm:$0xff]
        %v314 = vpack.c.bf16 %v302, %v301
        %v315 = vpack.c.bf16 %v304, %v303
        %v316 = vpack.c.bf16 %v306, %v305
        %v317 = vpack.c.bf16 %v308, %v307
        %v318 = vpack.c.bf16 %v310, %v309
        %v319 = vpack.c.bf16 %v312, %v311
        %v320 = vpack.c.bf16 %v313, %v313
        %v321 = vld [vmem:[%s1] sm:$0xf]
        %v322 = vld [vmem:[%s1 + $0x4] sm:$0xf]
        %v323 = vld [vmem:[%s1 + $0x8] sm:$0xf]
        %v324 = vld [vmem:[%s1 + $0xc] sm:$0xf]
        %v325 = vld [vmem:[%s2] sm:$0x1]
        %v327 = vlaneseq
        %v328 = vshrl.u32 %v327, 7
        %v329 = vsub.s32 0, %v328
        %v330 = vrot.slane %v325, %v329
        %v336 = vunpack.c.l.b16 %v321
        %v337 = vunpack.c.l.b16 %v322
        %v338 = vunpack.c.l.b16 %v323
        %v339 = vunpack.c.l.b16 %v324
        %v340 = vpack.c.b16 %v337, %v336
        %v341 = vpack.c.b16 %v339, %v338
        %vm344 = vcmask 261120
        %v346 = vsel %vm344, %v314, 0
        %v349 = vsel %vm344, %v315, 0
        %v352 = vsel %vm344, %v316, 0
        %v355 = vsel %vm344, %v317, 0
        %v358 = vsel %vm344, %v318, 0
        %v361 = vsel %vm344, %v319, 0
        %v364 = vsel %vm344, %v320, 0
        %366 = vmatprep.subr.bf16.mxu0 0
        %367 = vmatpush1.bf16.msra.mxu0 0
        %368 = vmatprep.subr.bf16.mxu0 0
        %369 = vmatpush1.bf16.msra.mxu0 0
        %370 = vmatprep.subr.bf16.mxu0 0
        %371 = vmatpush1.bf16.msra.mxu0 0
        %372 = vmatprep.subr.bf16.mxu0 0
        %373 = vmatpush1.bf16.msra.mxu0 0
        %374 = vmatprep.subr.bf16.mxu0 0
        %375 = vmatpush1.bf16.msra.mxu0 0
        %376 = vmatprep.subr.bf16.mxu0 0
        %377 = vmatpush1.bf16.msra.mxu0 0
        %378 = vmatprep.subr.bf16.mxu0 0
        %379 = vmatpush1.bf16.msra.mxu0 %v341
        %380 = vmatprep.subr.bf16.mxu0 0
        %381 = vmatpush1.bf16.msra.mxu0 %v340
        %382 = vmatprep.subr.bf16.mxu0 0
        %383 = vmatpush2.bf16.msra.mxu0 0
        %384 = vmatprep.subr.bf16.mxu0 0
        %385 = vmatpush2.bf16.msra.mxu0 0
        %386 = vmatprep.subr.bf16.mxu0 0
        %387 = vmatpush2.bf16.msra.mxu0 0
        %388 = vmatprep.subr.bf16.mxu0 0
        %389 = vmatpush2.bf16.msra.mxu0 0
        %390 = vmatprep.subr.bf16.mxu0 0
        %391 = vmatpush2.bf16.msra.mxu0 0
        %392 = vmatprep.subr.bf16.mxu0 0
        %393 = vmatpush2.bf16.msra.mxu0 0
        %394 = vmatprep.subr.bf16.mxu0 0
        %395 = vmatpush2.bf16.msra.mxu0 0
        %396 = vmatprep.subr.bf16.mxu0 0
        %397 = vmatpush2.bf16.msra.mxu0 0
        %398 = vmatprep.mubr.bf16.mxu0 0
        %399 = vmatmul.mubr.bf16.gmra.mxu0 %v346
        %v400 = vpop.f32.mrf.mxu0
        %v401 = vadd.f32 %v330, %v400
        %v402 = vpop.f32.mrf.mxu0
        %v403 = vpop.f32.mrf.mxu0
        %v404 = vadd.f32 %v330, %v403
        %v405 = vpop.f32.mrf.mxu0
        %406 = vmatprep.mubr.bf16.mxu0 0
        %407 = vmatmul.mubr.bf16.gmra.mxu0 %v349
        %v408 = vpop.f32.mrf.mxu0
        %v409 = vadd.f32 %v330, %v408
        %v410 = vpop.f32.mrf.mxu0
        %v411 = vpop.f32.mrf.mxu0
        %v412 = vadd.f32 %v330, %v411
        %v413 = vpop.f32.mrf.mxu0
        %414 = vmatprep.mubr.bf16.mxu0 0
        %415 = vmatmul.mubr.bf16.gmra.mxu0 %v352
        %v416 = vpop.f32.mrf.mxu0
        %v417 = vadd.f32 %v330, %v416
        %v418 = vpop.f32.mrf.mxu0
        %v419 = vpop.f32.mrf.mxu0
        %v420 = vadd.f32 %v330, %v419
        %v421 = vpop.f32.mrf.mxu0
        %422 = vmatprep.mubr.bf16.mxu0 0
        %423 = vmatmul.mubr.bf16.gmra.mxu0 %v355
        %v424 = vpop.f32.mrf.mxu0
        %v425 = vadd.f32 %v330, %v424
        %v426 = vpop.f32.mrf.mxu0
        %v427 = vpop.f32.mrf.mxu0
        %v428 = vadd.f32 %v330, %v427
        %v429 = vpop.f32.mrf.mxu0
        %430 = vmatprep.mubr.bf16.mxu0 0
        %431 = vmatmul.mubr.bf16.gmra.mxu0 %v358
        %v432 = vpop.f32.mrf.mxu0
        %v433 = vadd.f32 %v330, %v432
        %v434 = vpop.f32.mrf.mxu0
        %v435 = vpop.f32.mrf.mxu0
        %v436 = vadd.f32 %v330, %v435
        %v437 = vpop.f32.mrf.mxu0
        %438 = vmatprep.mubr.bf16.mxu0 0
        %439 = vmatmul.mubr.bf16.gmra.mxu0 %v361
        %v440 = vpop.f32.mrf.mxu0
        %v441 = vadd.f32 %v330, %v440
        %v442 = vpop.f32.mrf.mxu0
        %v443 = vpop.f32.mrf.mxu0
        %v444 = vadd.f32 %v330, %v443
        %v445 = vpop.f32.mrf.mxu0
        %446 = vmatprep.mubr.bf16.mxu0 0
        %447 = vmatmul.mubr.bf16.gmra.mxu0 %v364
        %v448 = vpop.f32.mrf.mxu0
        %v449 = vadd.f32 %v330, %v448
        %v450 = vpop.f32.mrf.mxu0
        %v451 = vpop.f32.mrf.mxu0
        %v452 = vpop.f32.mrf.mxu0
        %453 = vdwg.mxu0
        %v454 = vmax.f32 %v401, 0.0
        %v455 = vmax.f32 %v404, 0.0
        %v456 = vmax.f32 %v409, 0.0
        %v457 = vmax.f32 %v412, 0.0
        %v458 = vmax.f32 %v417, 0.0
        %v459 = vmax.f32 %v420, 0.0
        %v460 = vmax.f32 %v425, 0.0
        %v461 = vmax.f32 %v428, 0.0
        %v462 = vmax.f32 %v433, 0.0
        %v463 = vmax.f32 %v436, 0.0
        %v464 = vmax.f32 %v441, 0.0
        %v465 = vmax.f32 %v444, 0.0
        %v466 = vmax.f32 %v449, 0.0
        %v467 = vpack.c.bf16 %v455, %v454
        %v468 = vpack.c.bf16 %v457, %v456
        %v469 = vpack.c.bf16 %v459, %v458
        %v470 = vpack.c.bf16 %v461, %v460
        %v471 = vpack.c.bf16 %v463, %v462
        %v472 = vpack.c.bf16 %v465, %v464
        %v473 = vpack.c.bf16 %v466, %v466
        %v474 = vld [vmem:[%s3] sm:$0xf]
        %v475 = vld [vmem:[%s3 + $0x4] sm:$0xf]
        %v476 = vld [vmem:[%s3 + $0x8] sm:$0xf]
        %v477 = vld [vmem:[%s3 + $0xc] sm:$0xf]
        %v478 = vld [vmem:[%s3 + $0x10] sm:$0xf]
        %v479 = vld [vmem:[%s3 + $0x14] sm:$0xf]
        %v480 = vld [vmem:[%s3 + $0x18] sm:$0xf]
        %v481 = vld [vmem:[%s3 + $0x1c] sm:$0xf]
        %v482 = vld [vmem:[%s3 + $0x20] sm:$0xf]
        %v483 = vld [vmem:[%s3 + $0x24] sm:$0xf]
        %v484 = vld [vmem:[%s3 + $0x28] sm:$0xf]
        %v485 = vld [vmem:[%s3 + $0x2c] sm:$0xf]
        %v486 = vld [vmem:[%s3 + $0x30] sm:$0xf]
        %v487 = vld [vmem:[%s3 + $0x34] sm:$0xf]
        %v488 = vld [vmem:[%s3 + $0x38] sm:$0xf]
        %v489 = vld [vmem:[%s3 + $0x3c] sm:$0xf]
        %v490 = vld [vmem:[%s4] sm:$0x1]
        %v492 = vlaneseq
        %v493 = vshrl.u32 %v492, 7
        %v494 = vsub.s32 0, %v493
        %v495 = vrot.slane %v490, %v494
        %v513 = vunpack.c.l.b16 %v474
        %v514 = vunpack.c.l.b16 %v475
        %v515 = vunpack.c.l.b16 %v476
        %v516 = vunpack.c.l.b16 %v477
        %v517 = vunpack.c.l.b16 %v478
        %v518 = vunpack.c.l.b16 %v479
        %v519 = vunpack.c.l.b16 %v480
        %v520 = vunpack.c.l.b16 %v481
        %v521 = vunpack.c.l.b16 %v482
        %v522 = vunpack.c.l.b16 %v483
        %v523 = vunpack.c.l.b16 %v484
        %v524 = vunpack.c.l.b16 %v485
        %v525 = vunpack.c.l.b16 %v486
        %v526 = vunpack.c.l.b16 %v487
        %v527 = vunpack.c.l.b16 %v488
        %v528 = vunpack.c.l.b16 %v489
        %v529 = vpack.c.b16 %v514, %v513
        %v530 = vpack.c.b16 %v516, %v515
        %v531 = vpack.c.b16 %v518, %v517
        %v532 = vpack.c.b16 %v520, %v519
        %v533 = vpack.c.b16 %v522, %v521
        %v534 = vpack.c.b16 %v524, %v523
        %v535 = vpack.c.b16 %v526, %v525
        %v536 = vpack.c.b16 %v528, %v527
        %545 = vmatprep.subr.bf16.mxu0 0
        %546 = vmatpush1.bf16.msra.mxu0 %v536
        %547 = vmatprep.subr.bf16.mxu0 0
        %548 = vmatpush1.bf16.msra.mxu0 %v535
        %549 = vmatprep.subr.bf16.mxu0 0
        %550 = vmatpush1.bf16.msra.mxu0 %v534
        %551 = vmatprep.subr.bf16.mxu0 0
        %552 = vmatpush1.bf16.msra.mxu0 %v533
        %553 = vmatprep.subr.bf16.mxu0 0
        %554 = vmatpush1.bf16.msra.mxu0 %v532
        %555 = vmatprep.subr.bf16.mxu0 0
        %556 = vmatpush1.bf16.msra.mxu0 %v531
        %557 = vmatprep.subr.bf16.mxu0 0
        %558 = vmatpush1.bf16.msra.mxu0 %v530
        %559 = vmatprep.subr.bf16.mxu0 0
        %560 = vmatpush1.bf16.msra.mxu0 %v529
        %561 = vmatprep.subr.bf16.mxu0 0
        %562 = vmatpush2.bf16.msra.mxu0 0
        %563 = vmatprep.subr.bf16.mxu0 0
        %564 = vmatpush2.bf16.msra.mxu0 0
        %565 = vmatprep.subr.bf16.mxu0 0
        %566 = vmatpush2.bf16.msra.mxu0 0
        %567 = vmatprep.subr.bf16.mxu0 0
        %568 = vmatpush2.bf16.msra.mxu0 0
        %569 = vmatprep.subr.bf16.mxu0 0
        %570 = vmatpush2.bf16.msra.mxu0 0
        %571 = vmatprep.subr.bf16.mxu0 0
        %572 = vmatpush2.bf16.msra.mxu0 0
        %573 = vmatprep.subr.bf16.mxu0 0
        %574 = vmatpush2.bf16.msra.mxu0 0
        %575 = vmatprep.subr.bf16.mxu0 0
        %576 = vmatpush2.bf16.msra.mxu0 0
        %577 = vmatprep.mubr.bf16.mxu0 0
        %578 = vmatmul.mubr.bf16.gmra.mxu0 %v467
        %v579 = vpop.f32.mrf.mxu0
        %v580 = vadd.f32 %v495, %v579
        %v581 = vpop.f32.mrf.mxu0
        %v582 = vpop.f32.mrf.mxu0
        %v583 = vadd.f32 %v495, %v582
        %v584 = vpop.f32.mrf.mxu0
        %585 = vmatprep.mubr.bf16.mxu0 0
        %586 = vmatmul.mubr.bf16.gmra.mxu0 %v468
        %v587 = vpop.f32.mrf.mxu0
        %v588 = vadd.f32 %v495, %v587
        %v589 = vpop.f32.mrf.mxu0
        %v590 = vpop.f32.mrf.mxu0
        %v591 = vadd.f32 %v495, %v590
        %v592 = vpop.f32.mrf.mxu0
        %593 = vmatprep.mubr.bf16.mxu0 0
        %594 = vmatmul.mubr.bf16.gmra.mxu0 %v469
        %v595 = vpop.f32.mrf.mxu0
        %v596 = vadd.f32 %v495, %v595
        %v597 = vpop.f32.mrf.mxu0
        %v598 = vpop.f32.mrf.mxu0
        %v599 = vadd.f32 %v495, %v598
        %v600 = vpop.f32.mrf.mxu0
        %601 = vmatprep.mubr.bf16.mxu0 0
        %602 = vmatmul.mubr.bf16.gmra.mxu0 %v470
        %v603 = vpop.f32.mrf.mxu0
        %v604 = vadd.f32 %v495, %v603
        %v605 = vpop.f32.mrf.mxu0
        %v606 = vpop.f32.mrf.mxu0
        %v607 = vadd.f32 %v495, %v606
        %v608 = vpop.f32.mrf.mxu0
        %609 = vmatprep.mubr.bf16.mxu0 0
        %610 = vmatmul.mubr.bf16.gmra.mxu0 %v471
        %v611 = vpop.f32.mrf.mxu0
        %v612 = vadd.f32 %v495, %v611
        %v613 = vpop.f32.mrf.mxu0
        %v614 = vpop.f32.mrf.mxu0
        %v615 = vadd.f32 %v495, %v614
        %v616 = vpop.f32.mrf.mxu0
        %617 = vmatprep.mubr.bf16.mxu0 0
        %618 = vmatmul.mubr.bf16.gmra.mxu0 %v472
        %v619 = vpop.f32.mrf.mxu0
        %v620 = vadd.f32 %v495, %v619
        %v621 = vpop.f32.mrf.mxu0
        %v622 = vpop.f32.mrf.mxu0
        %v623 = vadd.f32 %v495, %v622
        %v624 = vpop.f32.mrf.mxu0
        %625 = vmatprep.mubr.bf16.mxu0 0
        %626 = vmatmul.mubr.bf16.gmra.mxu0 %v473
        %v627 = vpop.f32.mrf.mxu0
        %v628 = vadd.f32 %v495, %v627
        %v629 = vpop.f32.mrf.mxu0
        %v630 = vpop.f32.mrf.mxu0
        %v631 = vpop.f32.mrf.mxu0
        %632 = vdwg.mxu0
        %v633 = vmax.f32 %v580, 0.0
        %v634 = vmax.f32 %v583, 0.0
        %v635 = vmax.f32 %v588, 0.0
        %v636 = vmax.f32 %v591, 0.0
        %v637 = vmax.f32 %v596, 0.0
        %v638 = vmax.f32 %v599, 0.0
        %v639 = vmax.f32 %v604, 0.0
        %v640 = vmax.f32 %v607, 0.0
        %v641 = vmax.f32 %v612, 0.0
        %v642 = vmax.f32 %v615, 0.0
        %v643 = vmax.f32 %v620, 0.0
        %v644 = vmax.f32 %v623, 0.0
        %v645 = vmax.f32 %v628, 0.0
        %v646 = vpack.c.bf16 %v634, %v633
        %v647 = vpack.c.bf16 %v636, %v635
        %v648 = vpack.c.bf16 %v638, %v637
        %v649 = vpack.c.bf16 %v640, %v639
        %v650 = vpack.c.bf16 %v642, %v641
        %v651 = vpack.c.bf16 %v644, %v643
        %v652 = vpack.c.bf16 %v645, %v645
        %v653 = vld [vmem:[%s5] sm:$0xf]
        %v654 = vld [vmem:[%s5 + $0x4] sm:$0xf]
        %v655 = vld [vmem:[%s5 + $0x8] sm:$0xf]
        %v656 = vld [vmem:[%s5 + $0xc] sm:$0xf]
        %v657 = vld [vmem:[%s5 + $0x10] sm:$0xf]
        %v658 = vld [vmem:[%s5 + $0x14] sm:$0xf]
        %v659 = vld [vmem:[%s5 + $0x18] sm:$0xf]
        %v660 = vld [vmem:[%s5 + $0x1c] sm:$0xf]
        %v661 = vld [vmem:[%s5 + $0x20] sm:$0xf]
        %v662 = vld [vmem:[%s5 + $0x24] sm:$0xf]
        %v663 = vld [vmem:[%s5 + $0x28] sm:$0xf]
        %v664 = vld [vmem:[%s5 + $0x2c] sm:$0xf]
        %v665 = vld [vmem:[%s5 + $0x30] sm:$0xf]
        %v666 = vld [vmem:[%s5 + $0x34] sm:$0xf]
        %v667 = vld [vmem:[%s5 + $0x38] sm:$0xf]
        %v668 = vld [vmem:[%s5 + $0x3c] sm:$0xf]
        %v669 = vld [vmem:[%s6] sm:$0x1]
        %v671 = vlaneseq
        %v672 = vshrl.u32 %v671, 7
        %v673 = vsub.s32 0, %v672
        %v674 = vrot.slane %v669, %v673
        %v692 = vunpack.c.l.b16 %v653
        %v693 = vunpack.c.l.b16 %v654
        %v694 = vunpack.c.l.b16 %v655
        %v695 = vunpack.c.l.b16 %v656
        %v696 = vunpack.c.l.b16 %v657
        %v697 = vunpack.c.l.b16 %v658
        %v698 = vunpack.c.l.b16 %v659
        %v699 = vunpack.c.l.b16 %v660
        %v700 = vunpack.c.l.b16 %v661
        %v701 = vunpack.c.l.b16 %v662
        %v702 = vunpack.c.l.b16 %v663
        %v703 = vunpack.c.l.b16 %v664
        %v704 = vunpack.c.l.b16 %v665
        %v705 = vunpack.c.l.b16 %v666
        %v706 = vunpack.c.l.b16 %v667
        %v707 = vunpack.c.l.b16 %v668
        %v708 = vpack.c.b16 %v693, %v692
        %v709 = vpack.c.b16 %v695, %v694
        %v710 = vpack.c.b16 %v697, %v696
        %v711 = vpack.c.b16 %v699, %v698
        %v712 = vpack.c.b16 %v701, %v700
        %v713 = vpack.c.b16 %v703, %v702
        %v714 = vpack.c.b16 %v705, %v704
        %v715 = vpack.c.b16 %v707, %v706
        %724 = vmatprep.subr.bf16.mxu0 0
        %725 = vmatpush1.bf16.msra.mxu0 %v715
        %726 = vmatprep.subr.bf16.mxu0 0
        %727 = vmatpush1.bf16.msra.mxu0 %v714
        %728 = vmatprep.subr.bf16.mxu0 0
        %729 = vmatpush1.bf16.msra.mxu0 %v713
        %730 = vmatprep.subr.bf16.mxu0 0
        %731 = vmatpush1.bf16.msra.mxu0 %v712
        %732 = vmatprep.subr.bf16.mxu0 0
        %733 = vmatpush1.bf16.msra.mxu0 %v711
        %734 = vmatprep.subr.bf16.mxu0 0
        %735 = vmatpush1.bf16.msra.mxu0 %v710
        %736 = vmatprep.subr.bf16.mxu0 0
        %737 = vmatpush1.bf16.msra.mxu0 %v709
        %738 = vmatprep.subr.bf16.mxu0 0
        %739 = vmatpush1.bf16.msra.mxu0 %v708
        %740 = vmatprep.subr.bf16.mxu0 0
        %741 = vmatpush2.bf16.msra.mxu0 0
        %742 = vmatprep.subr.bf16.mxu0 0
        %743 = vmatpush2.bf16.msra.mxu0 0
        %744 = vmatprep.subr.bf16.mxu0 0
        %745 = vmatpush2.bf16.msra.mxu0 0
        %746 = vmatprep.subr.bf16.mxu0 0
        %747 = vmatpush2.bf16.msra.mxu0 0
        %748 = vmatprep.subr.bf16.mxu0 0
        %749 = vmatpush2.bf16.msra.mxu0 0
        %750 = vmatprep.subr.bf16.mxu0 0
        %751 = vmatpush2.bf16.msra.mxu0 0
        %752 = vmatprep.subr.bf16.mxu0 0
        %753 = vmatpush2.bf16.msra.mxu0 0
        %754 = vmatprep.subr.bf16.mxu0 0
        %755 = vmatpush2.bf16.msra.mxu0 0
        %756 = vmatprep.mubr.bf16.mxu0 0
        %757 = vmatmul.mubr.bf16.gmra.mxu0 %v646
        %v758 = vpop.f32.mrf.mxu0
        %v759 = vadd.f32 %v674, %v758
        %v760 = vpop.f32.mrf.mxu0
        %v761 = vpop.f32.mrf.mxu0
        %v762 = vadd.f32 %v674, %v761
        %v763 = vpop.f32.mrf.mxu0
        %764 = vmatprep.mubr.bf16.mxu0 0
        %765 = vmatmul.mubr.bf16.gmra.mxu0 %v647
        %v766 = vpop.f32.mrf.mxu0
        %v767 = vadd.f32 %v674, %v766
        %v768 = vpop.f32.mrf.mxu0
        %v769 = vpop.f32.mrf.mxu0
        %v770 = vadd.f32 %v674, %v769
        %v771 = vpop.f32.mrf.mxu0
        %772 = vmatprep.mubr.bf16.mxu0 0
        %773 = vmatmul.mubr.bf16.gmra.mxu0 %v648
        %v774 = vpop.f32.mrf.mxu0
        %v775 = vadd.f32 %v674, %v774
        %v776 = vpop.f32.mrf.mxu0
        %v777 = vpop.f32.mrf.mxu0
        %v778 = vadd.f32 %v674, %v777
        %v779 = vpop.f32.mrf.mxu0
        %780 = vmatprep.mubr.bf16.mxu0 0
        %781 = vmatmul.mubr.bf16.gmra.mxu0 %v649
        %v782 = vpop.f32.mrf.mxu0
        %v783 = vadd.f32 %v674, %v782
        %v784 = vpop.f32.mrf.mxu0
        %v785 = vpop.f32.mrf.mxu0
        %v786 = vadd.f32 %v674, %v785
        %v787 = vpop.f32.mrf.mxu0
        %788 = vmatprep.mubr.bf16.mxu0 0
        %789 = vmatmul.mubr.bf16.gmra.mxu0 %v650
        %v790 = vpop.f32.mrf.mxu0
        %v791 = vadd.f32 %v674, %v790
        %v792 = vpop.f32.mrf.mxu0
        %v793 = vpop.f32.mrf.mxu0
        %v794 = vadd.f32 %v674, %v793
        %v795 = vpop.f32.mrf.mxu0
        %796 = vmatprep.mubr.bf16.mxu0 0
        %797 = vmatmul.mubr.bf16.gmra.mxu0 %v651
        %v798 = vpop.f32.mrf.mxu0
        %v799 = vadd.f32 %v674, %v798
        %v800 = vpop.f32.mrf.mxu0
        %v801 = vpop.f32.mrf.mxu0
        %v802 = vadd.f32 %v674, %v801
        %v803 = vpop.f32.mrf.mxu0
        %804 = vmatprep.mubr.bf16.mxu0 0
        %805 = vmatmul.mubr.bf16.gmra.mxu0 %v652
        %v806 = vpop.f32.mrf.mxu0
        %v807 = vadd.f32 %v674, %v806
        %v808 = vpop.f32.mrf.mxu0
        %v809 = vpop.f32.mrf.mxu0
        %v810 = vpop.f32.mrf.mxu0
        %811 = vdwg.mxu0
        %vm812 = vcmask 130048
        %813 = vst.msk [vmem:[%s280] sm:$0xff] %vm812, %v759
        %814 = vst.msk [vmem:[%s280 + $0x8] sm:$0xff] %vm812, %v762
        %815 = vst.msk [vmem:[%s280 + $0x10] sm:$0xff] %vm812, %v767
        %816 = vst.msk [vmem:[%s280 + $0x18] sm:$0xff] %vm812, %v770
        %817 = vst.msk [vmem:[%s280 + $0x20] sm:$0xff] %vm812, %v775
        %818 = vst.msk [vmem:[%s280 + $0x28] sm:$0xff] %vm812, %v778
        %819 = vst.msk [vmem:[%s280 + $0x30] sm:$0xff] %vm812, %v783
        %820 = vst.msk [vmem:[%s280 + $0x38] sm:$0xff] %vm812, %v786
        %821 = vst.msk [vmem:[%s280 + $0x40] sm:$0xff] %vm812, %v791
        %822 = vst.msk [vmem:[%s280 + $0x48] sm:$0xff] %vm812, %v794
        %823 = vst.msk [vmem:[%s280 + $0x50] sm:$0xff] %vm812, %v799
        %824 = vst.msk [vmem:[%s280 + $0x58] sm:$0xff] %vm812, %v802
        %825 = vst.msk [vmem:[%s280 + $0x60] sm:$0xff] %vm812, %v807
        %s826 = sand.u32 %s178, 1
        %s827 = sand.u32 %s178, 1
        %s828 = smul.addr %s827, 104
        %s829 = scalar_lea.vmem [#allocation2], %s828
        // Predicated region
        $region49: #{tpu_custom_call.1} parent=47 // pred_check
          %p830 = pneg %p188
        $region50: #{tpu_custom_call.1} parent=47 // pred_check_branch
          %832 = sbr.rel (%p830) target = $region52
        $region51: #{tpu_custom_call.1} parent=47 // pred_region
          %s833 = smul.u32 13, %s18
          %s834 = ssub.s32 25, %s833
          %p835 = scmp.lt.s32.totalorder %s834, 13
          %s836 = scalar_select %p835, %s834, 13
          %s837 = smul.u32 128, %s836
          %p838 = scmp.ne.s32.totalorder 0, %s837
          %s839 = smul.addr %s833, 8
          %s840 = scalar_lea.vmem %s7, %s839
          // Predicated region
          $region53: #{tpu_custom_call.1} parent=51 // pred_check
            %p841 = pneg %p838
          $region54: #{tpu_custom_call.1} parent=51 // pred_check_branch
            %843 = sbr.rel (%p841) target = $region56
          $region55: #{tpu_custom_call.1} parent=51 // pred_region
            // Predicated region
            $region57: #{tpu_custom_call.1} parent=55 // pred_check
              _
            $region58: #{tpu_custom_call.1} parent=55 // pred_check_branch
              %845 = sbr.rel (0) target = $region60
            $region59: #{tpu_custom_call.1} parent=55 // pred_region
              // Predicated region
              $region79: #{tpu_custom_call.1} parent=59 // pred_check
                _
              $region80: #{tpu_custom_call.1} parent=59 // pred_check_branch
                %920 = sbr.rel (0) target = $region82
              $region81: #{tpu_custom_call.1} parent=59 // pred_region
                %s921 = sdiv.u32.pop %s836, 13
                %s922 = srem.u32.pop %s836, 13
                // While loop
                $region83: #{tpu_custom_call.1} parent=81 // loop_pre_header
                  _
                $region84: #{tpu_custom_call.1} parent=81 // loop_header
                  %s924 = sphi 0, %s926
                  %p925 = scmp.ge.s32.totalorder %s924, %s921
                  %s929 = sphi 0, %s960
                  %s930 = sphi %s829, %s963
                  %s931 = sphi %s840, %s964
                $region85: #{tpu_custom_call.1} parent=81 // loop_header_branch
                  %928 = sbr.rel (%p925) target = $region89
                $region86: #{tpu_custom_call.1} parent=81 // loop_body
                  %v932 = vld [vmem:[%s930] sm:$0xff]
                  %933 = vst [vmem:[%s931] sm:$0xff] %v932
                  %v934 = vld [vmem:[%s930 + $0x8] sm:$0xff]
                  %935 = vst [vmem:[%s931 + $0x8] sm:$0xff] %v934
                  %v936 = vld [vmem:[%s930 + $0x10] sm:$0xff]
                  %937 = vst [vmem:[%s931 + $0x10] sm:$0xff] %v936
                  %v938 = vld [vmem:[%s930 + $0x18] sm:$0xff]
                  %939 = vst [vmem:[%s931 + $0x18] sm:$0xff] %v938
                  %v940 = vld [vmem:[%s930 + $0x20] sm:$0xff]
                  %941 = vst [vmem:[%s931 + $0x20] sm:$0xff] %v940
                  %v942 = vld [vmem:[%s930 + $0x28] sm:$0xff]
                  %943 = vst [vmem:[%s931 + $0x28] sm:$0xff] %v942
                  %v944 = vld [vmem:[%s930 + $0x30] sm:$0xff]
                  %945 = vst [vmem:[%s931 + $0x30] sm:$0xff] %v944
                  %v946 = vld [vmem:[%s930 + $0x38] sm:$0xff]
                  %947 = vst [vmem:[%s931 + $0x38] sm:$0xff] %v946
                  %v948 = vld [vmem:[%s930 + $0x40] sm:$0xff]
                  %949 = vst [vmem:[%s931 + $0x40] sm:$0xff] %v948
                  %v950 = vld [vmem:[%s930 + $0x48] sm:$0xff]
                  %951 = vst [vmem:[%s931 + $0x48] sm:$0xff] %v950
                  %v952 = vld [vmem:[%s930 + $0x50] sm:$0xff]
                  %953 = vst [vmem:[%s931 + $0x50] sm:$0xff] %v952
                  %v954 = vld [vmem:[%s930 + $0x58] sm:$0xff]
                  %955 = vst [vmem:[%s931 + $0x58] sm:$0xff] %v954
                  %v956 = vld [vmem:[%s930 + $0x60] sm:$0xff]
                  %957 = vst [vmem:[%s931 + $0x60] sm:$0xff] %v956
                  %s958 = sadd.s32 1, %s929
                  %p959 = scmp.ge.s32.totalorder %s958, %s921
                  %s960 = scalar_select %p959, 0, %s958
                  %s961 = smul.u32 %s960, 104
                  %s962 = smul.u32 %s960, 104
                  %s963 = scalar_lea.vmem %s829, %s961 [#allocation2]
                  %s964 = scalar_lea.vmem %s840, %s962
                $region87: #{tpu_custom_call.1} parent=81 // loop_footer
                  %s926 = sadd.s32 %s924, 1
                $region88: #{tpu_custom_call.1} parent=81 // loop_footer_branch
                  %923 = sbr.rel target = $region84
                $region89: #{tpu_custom_call.1} parent=81 // loop_exit
                  _
                %s965 = sdiv.u32.pop %s836, 13
                %s966 = srem.u32.pop %s836, 13
                %s967 = smul.u32 %s965, 13
                %s968 = smul.u32 8, %s967
                %s969 = scalar_lea.vmem %s829, %s968 [#allocation2]
                %s970 = smul.u32 8, %s967
                %s971 = scalar_lea.vmem %s840, %s970
                // While loop
                $region90: #{tpu_custom_call.1} parent=81 // loop_pre_header
                  _
                $region91: #{tpu_custom_call.1} parent=81 // loop_header
                  %s973 = sphi 0, %s975
                  %p974 = scmp.ge.s32.totalorder %s973, %s966
                  %s978 = sphi 0, %s985
                  %s979 = sphi %s969, %s988
                  %s980 = sphi %s971, %s989
                $region92: #{tpu_custom_call.1} parent=81 // loop_header_branch
                  %977 = sbr.rel (%p974) target = $region96
                $region93: #{tpu_custom_call.1} parent=81 // loop_body
                  %v981 = vld [vmem:[%s979] sm:$0xff]
                  %982 = vst [vmem:[%s980] sm:$0xff] %v981
                  %s983 = sadd.s32 1, %s978
                  %p984 = scmp.ge.s32.totalorder %s983, %s966
                  %s985 = scalar_select %p984, 0, %s983
                  %s986 = smul.u32 %s985, 8
                  %s987 = smul.u32 %s985, 8
                  %s988 = scalar_lea.vmem %s969, %s986 [#allocation2]
                  %s989 = scalar_lea.vmem %s971, %s987
                $region94: #{tpu_custom_call.1} parent=81 // loop_footer
                  %s975 = sadd.s32 %s973, 1
                $region95: #{tpu_custom_call.1} parent=81 // loop_footer_branch
                  %972 = sbr.rel target = $region91
                $region96: #{tpu_custom_call.1} parent=81 // loop_exit
                  _
              $region82: #{tpu_custom_call.1} parent=59 // pred_fallthru
                _
              // Predicated region
              $region97: #{tpu_custom_call.1} parent=59 // pred_check
                _
              $region98: #{tpu_custom_call.1} parent=59 // pred_check_branch
                %991 = sbr.rel target = $region100
              $region99: #{tpu_custom_call.1} parent=59 // pred_region
                _
              $region100: #{tpu_custom_call.1} parent=59 // pred_fallthru
                _
            $region60: #{tpu_custom_call.1} parent=55 // pred_fallthru
              _
            // Predicated region
            $region61: #{tpu_custom_call.1} parent=55 // pred_check
              _
            $region62: #{tpu_custom_call.1} parent=55 // pred_check_branch
              %847 = sbr.rel target = $region64
            $region63: #{tpu_custom_call.1} parent=55 // pred_region
              %s849 = ssub.s32 256, 1
              %s850 = sdiv.u32.pop %s836, 13
              %s851 = srem.u32.pop %s836, 13
              // While loop
              $region65: #{tpu_custom_call.1} parent=63 // loop_pre_header
                _
              $region66: #{tpu_custom_call.1} parent=63 // loop_header
                %s853 = sphi 0, %s855
                %p854 = scmp.ge.s32.totalorder %s853, %s850
                %s858 = sphi 0, %s889
                %s859 = sphi %s829, %s892
                %s860 = sphi %s840, %s893
              $region67: #{tpu_custom_call.1} parent=63 // loop_header_branch
                %857 = sbr.rel (%p854) target = $region71
              $region68: #{tpu_custom_call.1} parent=63 // loop_body
                %v861 = vld [vmem:[%s859] sm:%s849]
                %862 = vst [vmem:[%s860] sm:%s849] %v861
                %v863 = vld [vmem:[%s859 + $0x8] sm:%s849]
                %864 = vst [vmem:[%s860 + $0x8] sm:%s849] %v863
                %v865 = vld [vmem:[%s859 + $0x10] sm:%s849]
                %866 = vst [vmem:[%s860 + $0x10] sm:%s849] %v865
                %v867 = vld [vmem:[%s859 + $0x18] sm:%s849]
                %868 = vst [vmem:[%s860 + $0x18] sm:%s849] %v867
                %v869 = vld [vmem:[%s859 + $0x20] sm:%s849]
                %870 = vst [vmem:[%s860 + $0x20] sm:%s849] %v869
                %v871 = vld [vmem:[%s859 + $0x28] sm:%s849]
                %872 = vst [vmem:[%s860 + $0x28] sm:%s849] %v871
                %v873 = vld [vmem:[%s859 + $0x30] sm:%s849]
                %874 = vst [vmem:[%s860 + $0x30] sm:%s849] %v873
                %v875 = vld [vmem:[%s859 + $0x38] sm:%s849]
                %876 = vst [vmem:[%s860 + $0x38] sm:%s849] %v875
                %v877 = vld [vmem:[%s859 + $0x40] sm:%s849]
                %878 = vst [vmem:[%s860 + $0x40] sm:%s849] %v877
                %v879 = vld [vmem:[%s859 + $0x48] sm:%s849]
                %880 = vst [vmem:[%s860 + $0x48] sm:%s849] %v879
                %v881 = vld [vmem:[%s859 + $0x50] sm:%s849]
                %882 = vst [vmem:[%s860 + $0x50] sm:%s849] %v881
                %v883 = vld [vmem:[%s859 + $0x58] sm:%s849]
                %884 = vst [vmem:[%s860 + $0x58] sm:%s849] %v883
                %v885 = vld [vmem:[%s859 + $0x60] sm:%s849]
                %886 = vst [vmem:[%s860 + $0x60] sm:%s849] %v885
                %s887 = sadd.s32 1, %s858
                %p888 = scmp.ge.s32.totalorder %s887, %s850
                %s889 = scalar_select %p888, 0, %s887
                %s890 = smul.u32 %s889, 104
                %s891 = smul.u32 %s889, 104
                %s892 = scalar_lea.vmem %s829, %s890 [#allocation2]
                %s893 = scalar_lea.vmem %s840, %s891
              $region69: #{tpu_custom_call.1} parent=63 // loop_footer
                %s855 = sadd.s32 %s853, 1
              $region70: #{tpu_custom_call.1} parent=63 // loop_footer_branch
                %852 = sbr.rel target = $region66
              $region71: #{tpu_custom_call.1} parent=63 // loop_exit
                _
              %s894 = sdiv.u32.pop %s836, 13
              %s895 = srem.u32.pop %s836, 13
              %s896 = smul.u32 %s894, 13
              %s897 = smul.u32 8, %s896
              %s898 = scalar_lea.vmem %s829, %s897 [#allocation2]
              %s899 = smul.u32 8, %s896
              %s900 = scalar_lea.vmem %s840, %s899
              // While loop
              $region72: #{tpu_custom_call.1} parent=63 // loop_pre_header
                _
              $region73: #{tpu_custom_call.1} parent=63 // loop_header
                %s902 = sphi 0, %s904
                %p903 = scmp.ge.s32.totalorder %s902, %s895
                %s907 = sphi 0, %s914
                %s908 = sphi %s898, %s917
                %s909 = sphi %s900, %s918
              $region74: #{tpu_custom_call.1} parent=63 // loop_header_branch
                %906 = sbr.rel (%p903) target = $region78
              $region75: #{tpu_custom_call.1} parent=63 // loop_body
                %v910 = vld [vmem:[%s908] sm:%s849]
                %911 = vst [vmem:[%s909] sm:%s849] %v910
                %s912 = sadd.s32 1, %s907
                %p913 = scmp.ge.s32.totalorder %s912, %s895
                %s914 = scalar_select %p913, 0, %s912
                %s915 = smul.u32 %s914, 8
                %s916 = smul.u32 %s914, 8
                %s917 = scalar_lea.vmem %s898, %s915 [#allocation2]
                %s918 = scalar_lea.vmem %s900, %s916
              $region76: #{tpu_custom_call.1} parent=63 // loop_footer
                %s904 = sadd.s32 %s902, 1
              $region77: #{tpu_custom_call.1} parent=63 // loop_footer_branch
                %901 = sbr.rel target = $region73
              $region78: #{tpu_custom_call.1} parent=63 // loop_exit
                _
            $region64: #{tpu_custom_call.1} parent=55 // pred_fallthru
              _
          $region56: #{tpu_custom_call.1} parent=51 // pred_fallthru
            _
          %992 = vnop
        $region52: #{tpu_custom_call.1} parent=47 // pred_fallthru
          _
      $region48: #{tpu_custom_call.1} parent=5 // pred_fallthru
        _
      %p993 = scmp.le.s32.totalorder 2, %s13
      // Predicated region
      $region101: #{tpu_custom_call.1} parent=5 // pred_check
        %p994 = pneg %p993
      $region102: #{tpu_custom_call.1} parent=5 // pred_check_branch
        %996 = sbr.rel (%p994) target = $region104
      $region103: #{tpu_custom_call.1} parent=5 // pred_region
        %s997 = ssub.s32 %s13, 2
        // Predicated region
        $region105: #{tpu_custom_call.1} parent=103 // pred_check
          %p998 = pneg %p194
        $region106: #{tpu_custom_call.1} parent=103 // pred_check_branch
          %1000 = sbr.rel (%p998) target = $region108
        $region107: #{tpu_custom_call.1} parent=103 // pred_region
          %s1001 = sand.u32 %s179, 1
          %s1002 = sand.u32 %s179, 1
          %s1003 = smul.addr %s1002, 104
          %s1004 = scalar_lea.vmem [#allocation2], %s1003
        $region108: #{tpu_custom_call.1} parent=103 // pred_fallthru
          _
      $region104: #{tpu_custom_call.1} parent=5 // pred_fallthru
        _
    $region6: #{tpu_custom_call.1} parent=1 // loop_footer
      %s17 = sadd.s32 1, %s13
    $region7: #{tpu_custom_call.1} parent=1 // loop_footer_branch
      %12 = sbr.rel target = $region3
    $region8: #{tpu_custom_call.1} parent=1 // loop_exit
      _

// kernel: tpu_custom_call.1
$region0: #{tpu_custom_call.1}
  #allocation0 [shape = 'u32[]', space=smem, size = 0x4, offset = 0x4, fixed_abs, tag = 'smem constant byte address 0x4 - core index']
  #allocation1 [shape = 'u32[144,128]{1,0:T(1,128)}', space=vmem, size = 0x12000, scoped, tag = 'internal scratch']
  %s0 = inlined_call_operand.vmem [shape: f32[200,32], index: 0, kind: input, shape index: {}]
  %s1 = inlined_call_operand.vmem [shape: bf16[32,128], index: 1, kind: input, shape index: {}]
  %s2 = inlined_call_operand.vmem [shape: f32[1,128], index: 2, kind: input, shape index: {}]
  %s3 = inlined_call_operand.vmem [shape: bf16[128,128], index: 3, kind: input, shape index: {}]
  %s4 = inlined_call_operand.vmem [shape: f32[1,128], index: 4, kind: input, shape index: {}]
  %s5 = inlined_call_operand.vmem [shape: bf16[128,16], index: 5, kind: input, shape index: {}]
  %s6 = inlined_call_operand.vmem [shape: f32[1,16], index: 6, kind: input, shape index: {}]
  %s7 = inlined_call_operand.vmem [shape: f32[200,16], index: 7, kind: output, shape index: {}]
  %s8 = sld [smem:[#allocation0]]
  $region109: #{tpu_custom_call.1} parent=0
    _
  %s10 = ssub.s32 1, %s8
  %s11 = scalar_select 0, %s10, %s8
  $region1: #{tpu_custom_call.1} parent=0
    #allocation2 [shape = 'u8[106496]{0}', space=vmem, size = 0x1a000, scoped, tag = 'output window, operand 0']
    loop: start=0, step=1, limit=4
    $region2: #{tpu_custom_call.1} parent=1 // loop_pre_header
      _
    $region3: #{tpu_custom_call.1} parent=1 // loop_header
      %s13 = sphi 0, %s17
      %p14 = scmp.ge.s32.totalorder %s13, 4
      %s23 = sphi 0, %s25
      %s26 = sphi 0, %s23
      %s27 = sphi 0, %s26
      %s43 = sphi 0, %s27
      %s47 = sphi 0, %s47
      %s49 = sphi 0, %s47
      %s50 = sphi 0, %s49
      %s64 = sphi 0, %s50
      %s68 = sphi 0, %s68
      %s70 = sphi 0, %s68
      %s71 = sphi 0, %s70
      %s85 = sphi 0, %s71
      %s89 = sphi 0, %s89
      %s91 = sphi 0, %s89
      %s92 = sphi 0, %s91
      %s106 = sphi 0, %s92
      %s110 = sphi 0, %s110
      %s112 = sphi 0, %s110
      %s113 = sphi 0, %s112
      %s127 = sphi 0, %s113
      %s131 = sphi 0, %s131
      %s133 = sphi 0, %s131
      %s134 = sphi 0, %s133
      %s148 = sphi 0, %s134
      %s152 = sphi 0, %s152
      %s154 = sphi 0, %s152
      %s155 = sphi 0, %s154
      %s169 = sphi 0, %s155
      %s175 = sphi 0, %s177
      %s178 = sphi 0, %s175
      %s179 = sphi 0, %s178
      %s195 = sphi 0, %s179
    $region4: #{tpu_custom_call.1} parent=1 // loop_header_branch
      %16 = sbr.rel (%p14) target = $region8
    $region5: #{tpu_custom_call.1} parent=1 // loop_body
      %s18 = ssub.s32 %s13, 1
      %s19 = ssub.s32 %s13, 2
      %s20 = sadd.s32 %s13, 1
      %s21 = ssub.s32 %s13, %s20
      %p22 = scmp.eq.s32.totalorder %s21, 0
      %s24 = sadd.s32 %s23, 1
      %s25 = scalar_select %p22, %s23, %s24
      %p28 = pneg %p22
      %p29 = scmp.eq.s32.totalorder %s13, 1
      %p30 = por %p28, %p29
      %p31 = scmp.ne.s32.totalorder %s23, %s26
      %p32 = scmp.eq.s32.totalorder %s13, 0
      %p33 = por %p31, %p32
      %p34 = scmp.ne.s32.totalorder %s23, %s26
      %p35 = scmp.eq.s32.totalorder %s18, 1
      %p36 = por %p34, %p35
      %p37 = scmp.ne.s32.totalorder %s26, %s27
      %p38 = scmp.eq.s32.totalorder %s18, 0
      %p39 = por %p37, %p38
      %p40 = scmp.ne.s32.totalorder %s26, %s27
      %p41 = scmp.eq.s32.totalorder %s19, 1
      %p42 = por %p40, %p41
      %p44 = scmp.ne.s32.totalorder %s27, %s43
      %p45 = scmp.eq.s32.totalorder %s19, 0
      %p46 = por %p44, %p45
      %s48 = sadd.s32 %s47, 1
      %p51 = scmp.eq.s32.totalorder %s13, 1
      %p52 = scmp.ne.s32.totalorder %s47, %s49
      %p53 = scmp.eq.s32.totalorder %s13, 0
      %p54 = por %p52, %p53
      %p55 = scmp.ne.s32.totalorder %s47, %s49
      %p56 = scmp.eq.s32.totalorder %s18, 1
      %p57 = por %p55, %p56
      %p58 = scmp.ne.s32.totalorder %s49, %s50
      %p59 = scmp.eq.s32.totalorder %s18, 0
      %p60 = por %p58, %p59
      %p61 = scmp.ne.s32.totalorder %s49, %s50
      %p62 = scmp.eq.s32.totalorder %s19, 1
      %p63 = por %p61, %p62
      %p65 = scmp.ne.s32.totalorder %s50, %s64
      %p66 = scmp.eq.s32.totalorder %s19, 0
      %p67 = por %p65, %p66
      %s69 = sadd.s32 %s68, 1
      %p72 = scmp.eq.s32.totalorder %s13, 1
      %p73 = scmp.ne.s32.totalorder %s68, %s70
      %p74 = scmp.eq.s32.totalorder %s13, 0
      %p75 = por %p73, %p74
      %p76 = scmp.ne.s32.totalorder %s68, %s70
      %p77 = scmp.eq.s32.totalorder %s18, 1
      %p78 = por %p76, %p77
      %p79 = scmp.ne.s32.totalorder %s70, %s71
      %p80 = scmp.eq.s32.totalorder %s18, 0
      %p81 = por %p79, %p80
      %p82 = scmp.ne.s32.totalorder %s70, %s71
      %p83 = scmp.eq.s32.totalorder %s19, 1
      %p84 = por %p82, %p83
      %p86 = scmp.ne.s32.totalorder %s71, %s85
      %p87 = scmp.eq.s32.totalorder %s19, 0
      %p88 = por %p86, %p87
      %s90 = sadd.s32 %s89, 1
      %p93 = scmp.eq.s32.totalorder %s13, 1
      %p94 = scmp.ne.s32.totalorder %s89, %s91
      %p95 = scmp.eq.s32.totalorder %s13, 0
      %p96 = por %p94, %p95
      %p97 = scmp.ne.s32.totalorder %s89, %s91
      %p98 = scmp.eq.s32.totalorder %s18, 1
      %p99 = por %p97, %p98
      %p100 = scmp.ne.s32.totalorder %s91, %s92
      %p101 = scmp.eq.s32.totalorder %s18, 0
      %p102 = por %p100, %p101
      %p103 = scmp.ne.s32.totalorder %s91, %s92
      %p104 = scmp.eq.s32.totalorder %s19, 1
      %p105 = por %p103, %p104
      %p107 = scmp.ne.s32.totalorder %s92, %s106
      %p108 = scmp.eq.s32.totalorder %s19, 0
      %p109 = por %p107, %p108
      %s111 = sadd.s32 %s110, 1
      %p114 = scmp.eq.s32.totalorder %s13, 1
      %p115 = scmp.ne.s32.totalorder %s110, %s112
      %p116 = scmp.eq.s32.totalorder %s13, 0
      %p117 = por %p115, %p116
      %p118 = scmp.ne.s32.totalorder %s110, %s112
      %p119 = scmp.eq.s32.totalorder %s18, 1
      %p120 = por %p118, %p119
      %p121 = scmp.ne.s32.totalorder %s112, %s113
      %p122 = scmp.eq.s32.totalorder %s18, 0
      %p123 = por %p121, %p122
      %p124 = scmp.ne.s32.totalorder %s112, %s113
      %p125 = scmp.eq.s32.totalorder %s19, 1
      %p126 = por %p124, %p125
      %p128 = scmp.ne.s32.totalorder %s113, %s127
      %p129 = scmp.eq.s32.totalorder %s19, 0
      %p130 = por %p128, %p129
      %s132 = sadd.s32 %s131, 1
      %p135 = scmp.eq.s32.totalorder %s13, 1
      %p136 = scmp.ne.s32.totalorder %s131, %s133
      %p137 = scmp.eq.s32.totalorder %s13, 0
      %p138 = por %p136, %p137
      %p139 = scmp.ne.s32.totalorder %s131, %s133
      %p140 = scmp.eq.s32.totalorder %s18, 1
      %p141 = por %p139, %p140
      %p142 = scmp.ne.s32.totalorder %s133, %s134
      %p143 = scmp.eq.s32.totalorder %s18, 0
      %p144 = por %p142, %p143
      %p145 = scmp.ne.s32.totalorder %s133, %s134
      %p146 = scmp.eq.s32.totalorder %s19, 1
      %p147 = por %p145, %p146
      %p149 = scmp.ne.s32.totalorder %s134, %s148
      %p150 = scmp.eq.s32.totalorder %s19, 0
      %p151 = por %p149, %p150
      %s153 = sadd.s32 %s152, 1
      %p156 = scmp.eq.s32.totalorder %s13, 1
      %p157 = scmp.ne.s32.totalorder %s152, %s154
      %p158 = scmp.eq.s32.totalorder %s13, 0
      %p159 = por %p157, %p158
      %p160 = scmp.ne.s32.totalorder %s152, %s154
      %p161 = scmp.eq.s32.totalorder %s18, 1
      %p162 = por %p160, %p161
      %p163 = scmp.ne.s32.totalorder %s154, %s155
      %p164 = scmp.eq.s32.totalorder %s18, 0
      %p165 = por %p163, %p164
      %p166 = scmp.ne.s32.totalorder %s154, %s155
      %p167 = scmp.eq.s32.totalorder %s19, 1
      %p168 = por %p166, %p167
      %p170 = scmp.ne.s32.totalorder %s155, %s169
      %p171 = scmp.eq.s32.totalorder %s19, 0
      %p172 = por %p170, %p171
      %s173 = ssub.s32 %s13, %s20
      %p174 = scmp.eq.s32.totalorder %s173, 0
      %s176 = sadd.s32 %s175, 1
      %s177 = scalar_select %p174, %s175, %s176
      %p180 = pneg %p174
      %p181 = scmp.eq.s32.totalorder %s13, 1
      %p182 = por %p180, %p181
      %p183 = scmp.ne.s32.totalorder %s175, %s178
      %p184 = scmp.eq.s32.totalorder %s13, 0
      %p185 = por %p183, %p184
      %p186 = scmp.ne.s32.totalorder %s175, %s178
      %p187 = scmp.eq.s32.totalorder %s18, 1
      %p188 = por %p186, %p187
      %p189 = scmp.ne.s32.totalorder %s178, %s179
      %p190 = scmp.eq.s32.totalorder %s18, 0
      %p191 = por %p189, %p190
      %p192 = scmp.ne.s32.totalorder %s178, %s179
      %p193 = scmp.eq.s32.totalorder %s19, 1
      %p194 = por %p192, %p193
      %p196 = scmp.ne.s32.totalorder %s179, %s195
      %p197 = scmp.eq.s32.totalorder %s19, 0
      %p198 = por %p196, %p197
      %p199 = scmp.le.s32.totalorder 1, %s13
      %p200 = scmp.lt.s32.totalorder %s13, 3
      %p201 = pnand %p199, %p200
      %p202 = pneg %p201
      // Predicated region
      $region9: #{tpu_custom_call.1} parent=5 // pred_check
        _
      $region10: #{tpu_custom_call.1} parent=5 // pred_check_branch
        %204 = sbr.rel (%p201) target = $region12
      $region11: #{tpu_custom_call.1} parent=5 // pred_region
        %s205 = ssub.s32 %s13, 1
        // Predicated region
        $region13: #{tpu_custom_call.1} parent=11 // pred_check
          %p206 = pneg %p60
        $region14: #{tpu_custom_call.1} parent=11 // pred_check_branch
          %208 = sbr.rel (%p206) target = $region16
        $region15: #{tpu_custom_call.1} parent=11 // pred_region
          _
        $region16: #{tpu_custom_call.1} parent=11 // pred_fallthru
          _
        // Predicated region
        $region17: #{tpu_custom_call.1} parent=11 // pred_check
          %p209 = pneg %p81
        $region18: #{tpu_custom_call.1} parent=11 // pred_check_branch
          %211 = sbr.rel (%p209) target = $region20
        $region19: #{tpu_custom_call.1} parent=11 // pred_region
          _
        $region20: #{tpu_custom_call.1} parent=11 // pred_fallthru
          _
        // Predicated region
        $region21: #{tpu_custom_call.1} parent=11 // pred_check
          %p212 = pneg %p102
        $region22: #{tpu_custom_call.1} parent=11 // pred_check_branch
          %214 = sbr.rel (%p212) target = $region24
        $region23: #{tpu_custom_call.1} parent=11 // pred_region
          _
        $region24: #{tpu_custom_call.1} parent=11 // pred_fallthru
          _
        // Predicated region
        $region25: #{tpu_custom_call.1} parent=11 // pred_check
          %p215 = pneg %p123
        $region26: #{tpu_custom_call.1} parent=11 // pred_check_branch
          %217 = sbr.rel (%p215) target = $region28
        $region27: #{tpu_custom_call.1} parent=11 // pred_region
          _
        $region28: #{tpu_custom_call.1} parent=11 // pred_fallthru
          _
        // Predicated region
        $region29: #{tpu_custom_call.1} parent=11 // pred_check
          %p218 = pneg %p144
        $region30: #{tpu_custom_call.1} parent=11 // pred_check_branch
          %220 = sbr.rel (%p218) target = $region32
        $region31: #{tpu_custom_call.1} parent=11 // pred_region
          _
        $region32: #{tpu_custom_call.1} parent=11 // pred_fallthru
          _
        // Predicated region
        $region33: #{tpu_custom_call.1} parent=11 // pred_check
          %p221 = pneg %p165
        $region34: #{tpu_custom_call.1} parent=11 // pred_check_branch
          %223 = sbr.rel (%p221) target = $region36
        $region35: #{tpu_custom_call.1} parent=11 // pred_region
          _
        $region36: #{tpu_custom_call.1} parent=11 // pred_fallthru
          _
      $region12: #{tpu_custom_call.1} parent=5 // pred_fallthru
        _
      %p224 = scmp.lt.s32.totalorder %s13, 2
      // Predicated region
      $region37: #{tpu_custom_call.1} parent=5 // pred_check
        %p225 = pneg %p224
      $region38: #{tpu_custom_call.1} parent=5 // pred_check_branch
        %227 = sbr.rel (%p225) target = $region40
      $region39: #{tpu_custom_call.1} parent=5 // pred_region
        // Predicated region
        $region41: #{tpu_custom_call.1} parent=39 // pred_check
          %p228 = pneg %p33
        $region42: #{tpu_custom_call.1} parent=39 // pred_check_branch
          %230 = sbr.rel (%p228) target = $region44
        $region43: #{tpu_custom_call.1} parent=39 // pred_region
          %s231 = smul.u32 13, %s13
          %s232 = ssub.s32 25, %s231
          %p233 = scmp.lt.s32.totalorder %s232, 13
          %s234 = scalar_select %p233, %s232, 13
          %s235 = smul.u32 128, %s234
          %p236 = scmp.lt.s32.totalorder %s231, 24
          %s237 = scalar_select %p236, %s231, 24
          %s238 = smul.addr %s237, 8
          %s239 = scalar_lea.vmem %s0, %s238
          %s240 = smul.u32 13, %s13
          %s241 = ssub.s32 25, %s240
          %p242 = scmp.lt.s32.totalorder %s241, 13
          %s243 = scalar_select %p242, %s241, 13
          %s244 = smul.u32 128, %s243
        $region44: #{tpu_custom_call.1} parent=39 // pred_fallthru
          _
      $region40: #{tpu_custom_call.1} parent=5 // pred_fallthru
        _
      %p245 = scmp.le.s32.totalorder 1, %s13
      %p246 = scmp.lt.s32.totalorder %s13, 3
      %p247 = pnand %p245, %p246
      %p248 = pneg %p247
      // Predicated region
      $region45: #{tpu_custom_call.1} parent=5 // pred_check
        _
      $region46: #{tpu_custom_call.1} parent=5 // pred_check_branch
        %250 = sbr.rel (%p247) target = $region48
      $region47: #{tpu_custom_call.1} parent=5 // pred_region
        %s251 = ssub.s32 %s13, 1
        %s252 = smul.u32 13, %s18
        %s253 = ssub.s32 25, %s252
        %p254 = scmp.lt.s32.totalorder %s253, 13
        %s255 = scalar_select %p254, %s253, 13
        %s256 = smul.u32 128, %s255
        %p257 = scmp.lt.s32.totalorder %s252, 24
        %s258 = scalar_select %p257, %s252, 24
        %s259 = smul.addr %s258, 8
        %s260 = scalar_lea.vmem %s0, %s259
        %p261 = pneg %p39
        %p262 = pneg %p36
        %p263 = pneg %p60
        %p264 = pneg %p57
        %p265 = pneg %p81
        %p266 = pneg %p78
        %p267 = pneg %p102
        %p268 = pneg %p99
        %p269 = pneg %p123
        %p270 = pneg %p120
        %p271 = pneg %p144
        %p272 = pneg %p141
        %p273 = pneg %p165
        %p274 = pneg %p162
        %p275 = pneg %p191
        %p276 = pneg %p188
        %s277 = sand.u32 %s178, 1
        %s278 = sand.u32 %s178, 1
        %s279 = smul.addr %s278, 104
        %s280 = scalar_lea.vmem [#allocation2], %s279
        %s281 = smul.u32 13, %s18
        %s282 = ssub.s32 25, %s281
        %p283 = scmp.lt.s32.totalorder %s282, 13
        %s284 = scalar_select %p283, %s282, 13
        %s285 = smul.u32 128, %s284
        %p286 = scmp.lt.s32.totalorder %s281, 24
        %s287 = scalar_select %p286, %s281, 24
        %s288 = smul.addr %s287, 8
        %s289 = scalar_lea.vmem %s0, %s288
        %s290 = smul.u32 13, %s18
        %s291 = ssub.s32 25, %s290
        %p292 = scmp.lt.s32.totalorder %s291, 13
        %s293 = scalar_select %p292, %s291, 13
        %s294 = smul.u32 128, %s293
        %s295 = smul.u32 13, %s18
        %s296 = ssub.s32 25, %s295
        %p297 = scmp.lt.s32.totalorder %s296, 13
        %s298 = scalar_select %p297, %s296, 13
        %s299 = smul.u32 128, %s298
        %v301 = vld [vmem:[%s289] sm:$0xff]
        %v302 = vld [vmem:[%s289 + $0x8] sm:$0xff]
        %v303 = vld [vmem:[%s289 + $0x10] sm:$0xff]
        %v304 = vld [vmem:[%s289 + $0x18] sm:$0xff]
        %v305 = vld [vmem:[%s289 + $0x20] sm:$0xff]
        %v306 = vld [vmem:[%s289 + $0x28] sm:$0xff]
        %v307 = vld [vmem:[%s289 + $0x30] sm:$0xff]
        %v308 = vld [vmem:[%s289 + $0x38] sm:$0xff]
        %v309 = vld [vmem:[%s289 + $0x40] sm:$0xff]
        %v310 = vld [vmem:[%s289 + $0x48] sm:$0xff]
        %v311 = vld [vmem:[%s289 + $0x50] sm:$0xff]
        %v312 = vld [vmem:[%s289 + $0x58] sm:$0xff]
        %v313 = vld [vmem:[%s289 + $0x60] sm:$0xff]
        %v314 = vpack.c.bf16 %v302, %v301
        %v315 = vpack.c.bf16 %v304, %v303
        %v316 = vpack.c.bf16 %v306, %v305
        %v317 = vpack.c.bf16 %v308, %v307
        %v318 = vpack.c.bf16 %v310, %v309
        %v319 = vpack.c.bf16 %v312, %v311
        %v320 = vpack.c.bf16 %v313, %v313
        %v321 = vld [vmem:[%s1] sm:$0xf]
        %v322 = vld [vmem:[%s1 + $0x4] sm:$0xf]
        %v323 = vld [vmem:[%s1 + $0x8] sm:$0xf]
        %v324 = vld [vmem:[%s1 + $0xc] sm:$0xf]
        %v325 = vld [vmem:[%s2] sm:$0x1]
        %v327 = vlaneseq
        %v328 = vshrl.u32 %v327, 7
        %v329 = vsub.s32 0, %v328
        %v330 = vrot.slane %v325, %v329
        %v336 = vunpack.c.l.b16 %v321
        %v337 = vunpack.c.l.b16 %v322
        %v338 = vunpack.c.l.b16 %v323
        %v339 = vunpack.c.l.b16 %v324
        %v340 = vpack.c.b16 %v337, %v336
        %v341 = vpack.c.b16 %v339, %v338
        %vm344 = vcmask 261120
        %v346 = vsel %vm344, %v314, 0
        %v349 = vsel %vm344, %v315, 0
        %v352 = vsel %vm344, %v316, 0
        %v355 = vsel %vm344, %v317, 0
        %v358 = vsel %vm344, %v318, 0
        %v361 = vsel %vm344, %v319, 0
        %v364 = vsel %vm344, %v320, 0
        %366 = vmatprep.subr.bf16.mxu0 0
        %367 = vmatpush1.bf16.msra.mxu0 0
        %368 = vmatprep.subr.bf16.mxu0 0
        %369 = vmatpush1.bf16.msra.mxu0 0
        %370 = vmatprep.subr.bf16.mxu0 0
        %371 = vmatpush1.bf16.msra.mxu0 0
        %372 = vmatprep.subr.bf16.mxu0 0
        %373 = vmatpush1.bf16.msra.mxu0 0
        %374 = vmatprep.subr.bf16.mxu0 0
        %375 = vmatpush1.bf16.msra.mxu0 0
        %376 = vmatprep.subr.bf16.mxu0 0
        %377 = vmatpush1.bf16.msra.mxu0 0
        %378 = vmatprep.subr.bf16.mxu0 0
        %379 = vmatpush1.bf16.msra.mxu0 %v341
        %380 = vmatprep.subr.bf16.mxu0 0
        %381 = vmatpush1.bf16.msra.mxu0 %v340
        %382 = vmatprep.subr.bf16.mxu0 0
        %383 = vmatpush2.bf16.msra.mxu0 0
        %384 = vmatprep.subr.bf16.mxu0 0
        %385 = vmatpush2.bf16.msra.mxu0 0
        %386 = vmatprep.subr.bf16.mxu0 0
        %387 = vmatpush2.bf16.msra.mxu0 0
        %388 = vmatprep.subr.bf16.mxu0 0
        %389 = vmatpush2.bf16.msra.mxu0 0
        %390 = vmatprep.subr.bf16.mxu0 0
        %391 = vmatpush2.bf16.msra.mxu0 0
        %392 = vmatprep.subr.bf16.mxu0 0
        %393 = vmatpush2.bf16.msra.mxu0 0
        %394 = vmatprep.subr.bf16.mxu0 0
        %395 = vmatpush2.bf16.msra.mxu0 0
        %396 = vmatprep.subr.bf16.mxu0 0
        %397 = vmatpush2.bf16.msra.mxu0 0
        %398 = vmatprep.mubr.bf16.mxu0 0
        %399 = vmatmul.mubr.bf16.gmra.mxu0 %v346
        %v400 = vpop.f32.mrf.mxu0
        %v401 = vadd.f32 %v330, %v400
        %v402 = vpop.f32.mrf.mxu0
        %v403 = vpop.f32.mrf.mxu0
        %v404 = vadd.f32 %v330, %v403
        %v405 = vpop.f32.mrf.mxu0
        %406 = vmatprep.mubr.bf16.mxu0 0
        %407 = vmatmul.mubr.bf16.gmra.mxu0 %v349
        %v408 = vpop.f32.mrf.mxu0
        %v409 = vadd.f32 %v330, %v408
        %v410 = vpop.f32.mrf.mxu0
        %v411 = vpop.f32.mrf.mxu0
        %v412 = vadd.f32 %v330, %v411
        %v413 = vpop.f32.mrf.mxu0
        %414 = vmatprep.mubr.bf16.mxu0 0
        %415 = vmatmul.mubr.bf16.gmra.mxu0 %v352
        %v416 = vpop.f32.mrf.mxu0
        %v417 = vadd.f32 %v330, %v416
        %v418 = vpop.f32.mrf.mxu0
        %v419 = vpop.f32.mrf.mxu0
        %v420 = vadd.f32 %v330, %v419
        %v421 = vpop.f32.mrf.mxu0
        %422 = vmatprep.mubr.bf16.mxu0 0
        %423 = vmatmul.mubr.bf16.gmra.mxu0 %v355
        %v424 = vpop.f32.mrf.mxu0
        %v425 = vadd.f32 %v330, %v424
        %v426 = vpop.f32.mrf.mxu0
        %v427 = vpop.f32.mrf.mxu0
        %v428 = vadd.f32 %v330, %v427
        %v429 = vpop.f32.mrf.mxu0
        %430 = vmatprep.mubr.bf16.mxu0 0
        %431 = vmatmul.mubr.bf16.gmra.mxu0 %v358
        %v432 = vpop.f32.mrf.mxu0
        %v433 = vadd.f32 %v330, %v432
        %v434 = vpop.f32.mrf.mxu0
        %v435 = vpop.f32.mrf.mxu0
        %v436 = vadd.f32 %v330, %v435
        %v437 = vpop.f32.mrf.mxu0
        %438 = vmatprep.mubr.bf16.mxu0 0
        %439 = vmatmul.mubr.bf16.gmra.mxu0 %v361
        %v440 = vpop.f32.mrf.mxu0
        %v441 = vadd.f32 %v330, %v440
        %v442 = vpop.f32.mrf.mxu0
        %v443 = vpop.f32.mrf.mxu0
        %v444 = vadd.f32 %v330, %v443
        %v445 = vpop.f32.mrf.mxu0
        %446 = vmatprep.mubr.bf16.mxu0 0
        %447 = vmatmul.mubr.bf16.gmra.mxu0 %v364
        %v448 = vpop.f32.mrf.mxu0
        %v449 = vadd.f32 %v330, %v448
        %v450 = vpop.f32.mrf.mxu0
        %v451 = vpop.f32.mrf.mxu0
        %v452 = vpop.f32.mrf.mxu0
        %453 = vdwg.mxu0
        %v454 = vmax.f32 %v401, 0.0
        %v455 = vmax.f32 %v404, 0.0
        %v456 = vmax.f32 %v409, 0.0
        %v457 = vmax.f32 %v412, 0.0
        %v458 = vmax.f32 %v417, 0.0
        %v459 = vmax.f32 %v420, 0.0
        %v460 = vmax.f32 %v425, 0.0
        %v461 = vmax.f32 %v428, 0.0
        %v462 = vmax.f32 %v433, 0.0
        %v463 = vmax.f32 %v436, 0.0
        %v464 = vmax.f32 %v441, 0.0
        %v465 = vmax.f32 %v444, 0.0
        %v466 = vmax.f32 %v449, 0.0
        %v467 = vpack.c.bf16 %v455, %v454
        %v468 = vpack.c.bf16 %v457, %v456
        %v469 = vpack.c.bf16 %v459, %v458
        %v470 = vpack.c.bf16 %v461, %v460
        %v471 = vpack.c.bf16 %v463, %v462
        %v472 = vpack.c.bf16 %v465, %v464
        %v473 = vpack.c.bf16 %v466, %v466
        %v474 = vld [vmem:[%s3] sm:$0xf]
        %v475 = vld [vmem:[%s3 + $0x4] sm:$0xf]
        %v476 = vld [vmem:[%s3 + $0x8] sm:$0xf]
        %v477 = vld [vmem:[%s3 + $0xc] sm:$0xf]
        %v478 = vld [vmem:[%s3 + $0x10] sm:$0xf]
        %v479 = vld [vmem:[%s3 + $0x14] sm:$0xf]
        %v480 = vld [vmem:[%s3 + $0x18] sm:$0xf]
        %v481 = vld [vmem:[%s3 + $0x1c] sm:$0xf]
        %v482 = vld [vmem:[%s3 + $0x20] sm:$0xf]
        %v483 = vld [vmem:[%s3 + $0x24] sm:$0xf]
        %v484 = vld [vmem:[%s3 + $0x28] sm:$0xf]
        %v485 = vld [vmem:[%s3 + $0x2c] sm:$0xf]
        %v486 = vld [vmem:[%s3 + $0x30] sm:$0xf]
        %v487 = vld [vmem:[%s3 + $0x34] sm:$0xf]
        %v488 = vld [vmem:[%s3 + $0x38] sm:$0xf]
        %v489 = vld [vmem:[%s3 + $0x3c] sm:$0xf]
        %v490 = vld [vmem:[%s4] sm:$0x1]
        %v492 = vlaneseq
        %v493 = vshrl.u32 %v492, 7
        %v494 = vsub.s32 0, %v493
        %v495 = vrot.slane %v490, %v494
        %v513 = vunpack.c.l.b16 %v474
        %v514 = vunpack.c.l.b16 %v475
        %v515 = vunpack.c.l.b16 %v476
        %v516 = vunpack.c.l.b16 %v477
        %v517 = vunpack.c.l.b16 %v478
        %v518 = vunpack.c.l.b16 %v479
        %v519 = vunpack.c.l.b16 %v480
        %v520 = vunpack.c.l.b16 %v481
        %v521 = vunpack.c.l.b16 %v482
        %v522 = vunpack.c.l.b16 %v483
        %v523 = vunpack.c.l.b16 %v484
        %v524 = vunpack.c.l.b16 %v485
        %v525 = vunpack.c.l.b16 %v486
        %v526 = vunpack.c.l.b16 %v487
        %v527 = vunpack.c.l.b16 %v488
        %v528 = vunpack.c.l.b16 %v489
        %v529 = vpack.c.b16 %v514, %v513
        %v530 = vpack.c.b16 %v516, %v515
        %v531 = vpack.c.b16 %v518, %v517
        %v532 = vpack.c.b16 %v520, %v519
        %v533 = vpack.c.b16 %v522, %v521
        %v534 = vpack.c.b16 %v524, %v523
        %v535 = vpack.c.b16 %v526, %v525
        %v536 = vpack.c.b16 %v528, %v527
        %545 = vmatprep.subr.bf16.mxu0 0
        %546 = vmatpush1.bf16.msra.mxu0 %v536
        %547 = vmatprep.subr.bf16.mxu0 0
        %548 = vmatpush1.bf16.msra.mxu0 %v535
        %549 = vmatprep.subr.bf16.mxu0 0
        %550 = vmatpush1.bf16.msra.mxu0 %v534
        %551 = vmatprep.subr.bf16.mxu0 0
        %552 = vmatpush1.bf16.msra.mxu0 %v533
        %553 = vmatprep.subr.bf16.mxu0 0
        %554 = vmatpush1.bf16.msra.mxu0 %v532
        %555 = vmatprep.subr.bf16.mxu0 0
        %556 = vmatpush1.bf16.msra.mxu0 %v531
        %557 = vmatprep.subr.bf16.mxu0 0
        %558 = vmatpush1.bf16.msra.mxu0 %v530
        %559 = vmatprep.subr.bf16.mxu0 0
        %560 = vmatpush1.bf16.msra.mxu0 %v529
        %561 = vmatprep.subr.bf16.mxu0 0
        %562 = vmatpush2.bf16.msra.mxu0 0
        %563 = vmatprep.subr.bf16.mxu0 0
        %564 = vmatpush2.bf16.msra.mxu0 0
        %565 = vmatprep.subr.bf16.mxu0 0
        %566 = vmatpush2.bf16.msra.mxu0 0
        %567 = vmatprep.subr.bf16.mxu0 0
        %568 = vmatpush2.bf16.msra.mxu0 0
        %569 = vmatprep.subr.bf16.mxu0 0
        %570 = vmatpush2.bf16.msra.mxu0 0
        %571 = vmatprep.subr.bf16.mxu0 0
        %572 = vmatpush2.bf16.msra.mxu0 0
        %573 = vmatprep.subr.bf16.mxu0 0
        %574 = vmatpush2.bf16.msra.mxu0 0
        %575 = vmatprep.subr.bf16.mxu0 0
        %576 = vmatpush2.bf16.msra.mxu0 0
        %577 = vmatprep.mubr.bf16.mxu0 0
        %578 = vmatmul.mubr.bf16.gmra.mxu0 %v467
        %v579 = vpop.f32.mrf.mxu0
        %v580 = vadd.f32 %v495, %v579
        %v581 = vpop.f32.mrf.mxu0
        %v582 = vpop.f32.mrf.mxu0
        %v583 = vadd.f32 %v495, %v582
        %v584 = vpop.f32.mrf.mxu0
        %585 = vmatprep.mubr.bf16.mxu0 0
        %586 = vmatmul.mubr.bf16.gmra.mxu0 %v468
        %v587 = vpop.f32.mrf.mxu0
        %v588 = vadd.f32 %v495, %v587
        %v589 = vpop.f32.mrf.mxu0
        %v590 = vpop.f32.mrf.mxu0
        %v591 = vadd.f32 %v495, %v590
        %v592 = vpop.f32.mrf.mxu0
        %593 = vmatprep.mubr.bf16.mxu0 0
        %594 = vmatmul.mubr.bf16.gmra.mxu0 %v469
        %v595 = vpop.f32.mrf.mxu0
        %v596 = vadd.f32 %v495, %v595
        %v597 = vpop.f32.mrf.mxu0
        %v598 = vpop.f32.mrf.mxu0
        %v599 = vadd.f32 %v495, %v598
        %v600 = vpop.f32.mrf.mxu0
        %601 = vmatprep.mubr.bf16.mxu0 0
        %602 = vmatmul.mubr.bf16.gmra.mxu0 %v470
        %v603 = vpop.f32.mrf.mxu0
        %v604 = vadd.f32 %v495, %v603
        %v605 = vpop.f32.mrf.mxu0
        %v606 = vpop.f32.mrf.mxu0
        %v607 = vadd.f32 %v495, %v606
        %v608 = vpop.f32.mrf.mxu0
        %609 = vmatprep.mubr.bf16.mxu0 0
        %610 = vmatmul.mubr.bf16.gmra.mxu0 %v471
        %v611 = vpop.f32.mrf.mxu0
        %v612 = vadd.f32 %v495, %v611
        %v613 = vpop.f32.mrf.mxu0
        %v614 = vpop.f32.mrf.mxu0
        %v615 = vadd.f32 %v495, %v614
        %v616 = vpop.f32.mrf.mxu0
        %617 = vmatprep.mubr.bf16.mxu0 0
        %618 = vmatmul.mubr.bf16.gmra.mxu0 %v472
        %v619 = vpop.f32.mrf.mxu0
        %v620 = vadd.f32 %v495, %v619
        %v621 = vpop.f32.mrf.mxu0
        %v622 = vpop.f32.mrf.mxu0
        %v623 = vadd.f32 %v495, %v622
        %v624 = vpop.f32.mrf.mxu0
        %625 = vmatprep.mubr.bf16.mxu0 0
        %626 = vmatmul.mubr.bf16.gmra.mxu0 %v473
        %v627 = vpop.f32.mrf.mxu0
        %v628 = vadd.f32 %v495, %v627
        %v629 = vpop.f32.mrf.mxu0
        %v630 = vpop.f32.mrf.mxu0
        %v631 = vpop.f32.mrf.mxu0
        %632 = vdwg.mxu0
        %v633 = vmax.f32 %v580, 0.0
        %v634 = vmax.f32 %v583, 0.0
        %v635 = vmax.f32 %v588, 0.0
        %v636 = vmax.f32 %v591, 0.0
        %v637 = vmax.f32 %v596, 0.0
        %v638 = vmax.f32 %v599, 0.0
        %v639 = vmax.f32 %v604, 0.0
        %v640 = vmax.f32 %v607, 0.0
        %v641 = vmax.f32 %v612, 0.0
        %v642 = vmax.f32 %v615, 0.0
        %v643 = vmax.f32 %v620, 0.0
        %v644 = vmax.f32 %v623, 0.0
        %v645 = vmax.f32 %v628, 0.0
        %v646 = vpack.c.bf16 %v634, %v633
        %v647 = vpack.c.bf16 %v636, %v635
        %v648 = vpack.c.bf16 %v638, %v637
        %v649 = vpack.c.bf16 %v640, %v639
        %v650 = vpack.c.bf16 %v642, %v641
        %v651 = vpack.c.bf16 %v644, %v643
        %v652 = vpack.c.bf16 %v645, %v645
        %v653 = vld [vmem:[%s5] sm:$0xf]
        %v654 = vld [vmem:[%s5 + $0x4] sm:$0xf]
        %v655 = vld [vmem:[%s5 + $0x8] sm:$0xf]
        %v656 = vld [vmem:[%s5 + $0xc] sm:$0xf]
        %v657 = vld [vmem:[%s5 + $0x10] sm:$0xf]
        %v658 = vld [vmem:[%s5 + $0x14] sm:$0xf]
        %v659 = vld [vmem:[%s5 + $0x18] sm:$0xf]
        %v660 = vld [vmem:[%s5 + $0x1c] sm:$0xf]
        %v661 = vld [vmem:[%s5 + $0x20] sm:$0xf]
        %v662 = vld [vmem:[%s5 + $0x24] sm:$0xf]
        %v663 = vld [vmem:[%s5 + $0x28] sm:$0xf]
        %v664 = vld [vmem:[%s5 + $0x2c] sm:$0xf]
        %v665 = vld [vmem:[%s5 + $0x30] sm:$0xf]
        %v666 = vld [vmem:[%s5 + $0x34] sm:$0xf]
        %v667 = vld [vmem:[%s5 + $0x38] sm:$0xf]
        %v668 = vld [vmem:[%s5 + $0x3c] sm:$0xf]
        %v669 = vld [vmem:[%s6] sm:$0x1]
        %v671 = vlaneseq
        %v672 = vshrl.u32 %v671, 7
        %v673 = vsub.s32 0, %v672
        %v674 = vrot.slane %v669, %v673
        %v692 = vunpack.c.l.b16 %v653
        %v693 = vunpack.c.l.b16 %v654
        %v694 = vunpack.c.l.b16 %v655
        %v695 = vunpack.c.l.b16 %v656
        %v696 = vunpack.c.l.b16 %v657
        %v697 = vunpack.c.l.b16 %v658
        %v698 = vunpack.c.l.b16 %v659
        %v699 = vunpack.c.l.b16 %v660
        %v700 = vunpack.c.l.b16 %v661
        %v701 = vunpack.c.l.b16 %v662
        %v702 = vunpack.c.l.b16 %v663
        %v703 = vunpack.c.l.b16 %v664
        %v704 = vunpack.c.l.b16 %v665
        %v705 = vunpack.c.l.b16 %v666
        %v706 = vunpack.c.l.b16 %v667
        %v707 = vunpack.c.l.b16 %v668
        %v708 = vpack.c.b16 %v693, %v692
        %v709 = vpack.c.b16 %v695, %v694
        %v710 = vpack.c.b16 %v697, %v696
        %v711 = vpack.c.b16 %v699, %v698
        %v712 = vpack.c.b16 %v701, %v700
        %v713 = vpack.c.b16 %v703, %v702
        %v714 = vpack.c.b16 %v705, %v704
        %v715 = vpack.c.b16 %v707, %v706
        %724 = vmatprep.subr.bf16.mxu0 0
        %725 = vmatpush1.bf16.msra.mxu0 %v715
        %726 = vmatprep.subr.bf16.mxu0 0
        %727 = vmatpush1.bf16.msra.mxu0 %v714
        %728 = vmatprep.subr.bf16.mxu0 0
        %729 = vmatpush1.bf16.msra.mxu0 %v713
        %730 = vmatprep.subr.bf16.mxu0 0
        %731 = vmatpush1.bf16.msra.mxu0 %v712
        %732 = vmatprep.subr.bf16.mxu0 0
        %733 = vmatpush1.bf16.msra.mxu0 %v711
        %734 = vmatprep.subr.bf16.mxu0 0
        %735 = vmatpush1.bf16.msra.mxu0 %v710
        %736 = vmatprep.subr.bf16.mxu0 0
        %737 = vmatpush1.bf16.msra.mxu0 %v709
        %738 = vmatprep.subr.bf16.mxu0 0
        %739 = vmatpush1.bf16.msra.mxu0 %v708
        %740 = vmatprep.subr.bf16.mxu0 0
        %741 = vmatpush2.bf16.msra.mxu0 0
        %742 = vmatprep.subr.bf16.mxu0 0
        %743 = vmatpush2.bf16.msra.mxu0 0
        %744 = vmatprep.subr.bf16.mxu0 0
        %745 = vmatpush2.bf16.msra.mxu0 0
        %746 = vmatprep.subr.bf16.mxu0 0
        %747 = vmatpush2.bf16.msra.mxu0 0
        %748 = vmatprep.subr.bf16.mxu0 0
        %749 = vmatpush2.bf16.msra.mxu0 0
        %750 = vmatprep.subr.bf16.mxu0 0
        %751 = vmatpush2.bf16.msra.mxu0 0
        %752 = vmatprep.subr.bf16.mxu0 0
        %753 = vmatpush2.bf16.msra.mxu0 0
        %754 = vmatprep.subr.bf16.mxu0 0
        %755 = vmatpush2.bf16.msra.mxu0 0
        %756 = vmatprep.mubr.bf16.mxu0 0
        %757 = vmatmul.mubr.bf16.gmra.mxu0 %v646
        %v758 = vpop.f32.mrf.mxu0
        %v759 = vadd.f32 %v674, %v758
        %v760 = vpop.f32.mrf.mxu0
        %v761 = vpop.f32.mrf.mxu0
        %v762 = vadd.f32 %v674, %v761
        %v763 = vpop.f32.mrf.mxu0
        %764 = vmatprep.mubr.bf16.mxu0 0
        %765 = vmatmul.mubr.bf16.gmra.mxu0 %v647
        %v766 = vpop.f32.mrf.mxu0
        %v767 = vadd.f32 %v674, %v766
        %v768 = vpop.f32.mrf.mxu0
        %v769 = vpop.f32.mrf.mxu0
        %v770 = vadd.f32 %v674, %v769
        %v771 = vpop.f32.mrf.mxu0
        %772 = vmatprep.mubr.bf16.mxu0 0
        %773 = vmatmul.mubr.bf16.gmra.mxu0 %v648
        %v774 = vpop.f32.mrf.mxu0
        %v775 = vadd.f32 %v674, %v774
        %v776 = vpop.f32.mrf.mxu0
        %v777 = vpop.f32.mrf.mxu0
        %v778 = vadd.f32 %v674, %v777
        %v779 = vpop.f32.mrf.mxu0
        %780 = vmatprep.mubr.bf16.mxu0 0
        %781 = vmatmul.mubr.bf16.gmra.mxu0 %v649
        %v782 = vpop.f32.mrf.mxu0
        %v783 = vadd.f32 %v674, %v782
        %v784 = vpop.f32.mrf.mxu0
        %v785 = vpop.f32.mrf.mxu0
        %v786 = vadd.f32 %v674, %v785
        %v787 = vpop.f32.mrf.mxu0
        %788 = vmatprep.mubr.bf16.mxu0 0
        %789 = vmatmul.mubr.bf16.gmra.mxu0 %v650
        %v790 = vpop.f32.mrf.mxu0
        %v791 = vadd.f32 %v674, %v790
        %v792 = vpop.f32.mrf.mxu0
        %v793 = vpop.f32.mrf.mxu0
        %v794 = vadd.f32 %v674, %v793
        %v795 = vpop.f32.mrf.mxu0
        %796 = vmatprep.mubr.bf16.mxu0 0
        %797 = vmatmul.mubr.bf16.gmra.mxu0 %v651
        %v798 = vpop.f32.mrf.mxu0
        %v799 = vadd.f32 %v674, %v798
        %v800 = vpop.f32.mrf.mxu0
        %v801 = vpop.f32.mrf.mxu0
        %v802 = vadd.f32 %v674, %v801
        %v803 = vpop.f32.mrf.mxu0
        %804 = vmatprep.mubr.bf16.mxu0 0
        %805 = vmatmul.mubr.bf16.gmra.mxu0 %v652
        %v806 = vpop.f32.mrf.mxu0
        %v807 = vadd.f32 %v674, %v806
        %v808 = vpop.f32.mrf.mxu0
        %v809 = vpop.f32.mrf.mxu0
        %v810 = vpop.f32.mrf.mxu0
        %811 = vdwg.mxu0
        %vm812 = vcmask 130048
        %813 = vst.msk [vmem:[%s280] sm:$0xff] %vm812, %v759
        %814 = vst.msk [vmem:[%s280 + $0x8] sm:$0xff] %vm812, %v762
        %815 = vst.msk [vmem:[%s280 + $0x10] sm:$0xff] %vm812, %v767
        %816 = vst.msk [vmem:[%s280 + $0x18] sm:$0xff] %vm812, %v770
        %817 = vst.msk [vmem:[%s280 + $0x20] sm:$0xff] %vm812, %v775
        %818 = vst.msk [vmem:[%s280 + $0x28] sm:$0xff] %vm812, %v778
        %819 = vst.msk [vmem:[%s280 + $0x30] sm:$0xff] %vm812, %v783
        %820 = vst.msk [vmem:[%s280 + $0x38] sm:$0xff] %vm812, %v786
        %821 = vst.msk [vmem:[%s280 + $0x40] sm:$0xff] %vm812, %v791
        %822 = vst.msk [vmem:[%s280 + $0x48] sm:$0xff] %vm812, %v794
        %823 = vst.msk [vmem:[%s280 + $0x50] sm:$0xff] %vm812, %v799
        %824 = vst.msk [vmem:[%s280 + $0x58] sm:$0xff] %vm812, %v802
        %825 = vst.msk [vmem:[%s280 + $0x60] sm:$0xff] %vm812, %v807
        %s826 = sand.u32 %s178, 1
        %s827 = sand.u32 %s178, 1
        %s828 = smul.addr %s827, 104
        %s829 = scalar_lea.vmem [#allocation2], %s828
        // Predicated region
        $region49: #{tpu_custom_call.1} parent=47 // pred_check
          %p830 = pneg %p188
        $region50: #{tpu_custom_call.1} parent=47 // pred_check_branch
          %832 = sbr.rel (%p830) target = $region52
        $region51: #{tpu_custom_call.1} parent=47 // pred_region
          %s833 = smul.u32 13, %s18
          %s834 = ssub.s32 25, %s833
          %p835 = scmp.lt.s32.totalorder %s834, 13
          %s836 = scalar_select %p835, %s834, 13
          %s837 = smul.u32 128, %s836
          %p838 = scmp.ne.s32.totalorder 0, %s837
          %s839 = smul.addr %s833, 8
          %s840 = scalar_lea.vmem %s7, %s839
          // Predicated region
          $region53: #{tpu_custom_call.1} parent=51 // pred_check
            %p841 = pneg %p838
          $region54: #{tpu_custom_call.1} parent=51 // pred_check_branch
            %843 = sbr.rel (%p841) target = $region56
          $region55: #{tpu_custom_call.1} parent=51 // pred_region
            // Predicated region
            $region57: #{tpu_custom_call.1} parent=55 // pred_check
              _
            $region58: #{tpu_custom_call.1} parent=55 // pred_check_branch
              %845 = sbr.rel (0) target = $region60
            $region59: #{tpu_custom_call.1} parent=55 // pred_region
              // Predicated region
              $region79: #{tpu_custom_call.1} parent=59 // pred_check
                _
              $region80: #{tpu_custom_call.1} parent=59 // pred_check_branch
                %920 = sbr.rel (0) target = $region82
              $region81: #{tpu_custom_call.1} parent=59 // pred_region
                %s921 = sdiv.u32.pop %s836, 13
                %s922 = srem.u32.pop %s836, 13
                // While loop
                $region83: #{tpu_custom_call.1} parent=81 // loop_pre_header
                  _
                $region84: #{tpu_custom_call.1} parent=81 // loop_header
                  %s924 = sphi 0, %s926
                  %p925 = scmp.ge.s32.totalorder %s924, %s921
                  %s929 = sphi 0, %s960
                  %s930 = sphi %s829, %s963
                  %s931 = sphi %s840, %s964
                $region85: #{tpu_custom_call.1} parent=81 // loop_header_branch
                  %928 = sbr.rel (%p925) target = $region89
                $region86: #{tpu_custom_call.1} parent=81 // loop_body
                  %v932 = vld [vmem:[%s930] sm:$0xff]
                  %933 = vst [vmem:[%s931] sm:$0xff] %v932
                  %v934 = vld [vmem:[%s930 + $0x8] sm:$0xff]
                  %935 = vst [vmem:[%s931 + $0x8] sm:$0xff] %v934
                  %v936 = vld [vmem:[%s930 + $0x10] sm:$0xff]
                  %937 = vst [vmem:[%s931 + $0x10] sm:$0xff] %v936
                  %v938 = vld [vmem:[%s930 + $0x18] sm:$0xff]
                  %939 = vst [vmem:[%s931 + $0x18] sm:$0xff] %v938
                  %v940 = vld [vmem:[%s930 + $0x20] sm:$0xff]
                  %941 = vst [vmem:[%s931 + $0x20] sm:$0xff] %v940
                  %v942 = vld [vmem:[%s930 + $0x28] sm:$0xff]
                  %943 = vst [vmem:[%s931 + $0x28] sm:$0xff] %v942
                  %v944 = vld [vmem:[%s930 + $0x30] sm:$0xff]
                  %945 = vst [vmem:[%s931 + $0x30] sm:$0xff] %v944
                  %v946 = vld [vmem:[%s930 + $0x38] sm:$0xff]
                  %947 = vst [vmem:[%s931 + $0x38] sm:$0xff] %v946
                  %v948 = vld [vmem:[%s930 + $0x40] sm:$0xff]
                  %949 = vst [vmem:[%s931 + $0x40] sm:$0xff] %v948
                  %v950 = vld [vmem:[%s930 + $0x48] sm:$0xff]
                  %951 = vst [vmem:[%s931 + $0x48] sm:$0xff] %v950
                  %v952 = vld [vmem:[%s930 + $0x50] sm:$0xff]
                  %953 = vst [vmem:[%s931 + $0x50] sm:$0xff] %v952
                  %v954 = vld [vmem:[%s930 + $0x58] sm:$0xff]
                  %955 = vst [vmem:[%s931 + $0x58] sm:$0xff] %v954
                  %v956 = vld [vmem:[%s930 + $0x60] sm:$0xff]
                  %957 = vst [vmem:[%s931 + $0x60] sm:$0xff] %v956
                  %s958 = sadd.s32 1, %s929
                  %p959 = scmp.ge.s32.totalorder %s958, %s921
                  %s960 = scalar_select %p959, 0, %s958
                  %s961 = smul.u32 %s960, 104
                  %s962 = smul.u32 %s960, 104
                  %s963 = scalar_lea.vmem %s829, %s961 [#allocation2]
                  %s964 = scalar_lea.vmem %s840, %s962
                $region87: #{tpu_custom_call.1} parent=81 // loop_footer
                  %s926 = sadd.s32 %s924, 1
                $region88: #{tpu_custom_call.1} parent=81 // loop_footer_branch
                  %923 = sbr.rel target = $region84
                $region89: #{tpu_custom_call.1} parent=81 // loop_exit
                  _
                %s965 = sdiv.u32.pop %s836, 13
                %s966 = srem.u32.pop %s836, 13
                %s967 = smul.u32 %s965, 13
                %s968 = smul.u32 8, %s967
                %s969 = scalar_lea.vmem %s829, %s968 [#allocation2]
                %s970 = smul.u32 8, %s967
                %s971 = scalar_lea.vmem %s840, %s970
                // While loop
                $region90: #{tpu_custom_call.1} parent=81 // loop_pre_header
                  _
                $region91: #{tpu_custom_call.1} parent=81 // loop_header
                  %s973 = sphi 0, %s975
                  %p974 = scmp.ge.s32.totalorder %s973, %s966
                  %s978 = sphi 0, %s985
                  %s979 = sphi %s969, %s988
                  %s980 = sphi %s971, %s989
                $region92: #{tpu_custom_call.1} parent=81 // loop_header_branch
                  %977 = sbr.rel (%p974) target = $region96
                $region93: #{tpu_custom_call.1} parent=81 // loop_body
                  %v981 = vld [vmem:[%s979] sm:$0xff]
                  %982 = vst [vmem:[%s980] sm:$0xff] %v981
                  %s983 = sadd.s32 1, %s978
                  %p984 = scmp.ge.s32.totalorder %s983, %s966
                  %s985 = scalar_select %p984, 0, %s983
                  %s986 = smul.u32 %s985, 8
                  %s987 = smul.u32 %s985, 8
                  %s988 = scalar_lea.vmem %s969, %s986 [#allocation2]
                  %s989 = scalar_lea.vmem %s971, %s987
                $region94: #{tpu_custom_call.1} parent=81 // loop_footer
                  %s975 = sadd.s32 %s973, 1
                $region95: #{tpu_custom_call.1} parent=81 // loop_footer_branch
                  %972 = sbr.rel target = $region91
                $region96: #{tpu_custom_call.1} parent=81 // loop_exit
                  _
              $region82: #{tpu_custom_call.1} parent=59 // pred_fallthru
                _
              // Predicated region
              $region97: #{tpu_custom_call.1} parent=59 // pred_check
                _
              $region98: #{tpu_custom_call.1} parent=59 // pred_check_branch
                %991 = sbr.rel target = $region100
              $region99: #{tpu_custom_call.1} parent=59 // pred_region
                _
              $region100: #{tpu_custom_call.1} parent=59 // pred_fallthru
                _
            $region60: #{tpu_custom_call.1} parent=55 // pred_fallthru
              _
            // Predicated region
            $region61: #{tpu_custom_call.1} parent=55 // pred_check
              _
            $region62: #{tpu_custom_call.1} parent=55 // pred_check_branch
              %847 = sbr.rel target = $region64
            $region63: #{tpu_custom_call.1} parent=55 // pred_region
              %s849 = ssub.s32 256, 1
              %s850 = sdiv.u32.pop %s836, 13
              %s851 = srem.u32.pop %s836, 13
              // While loop
              $region65: #{tpu_custom_call.1} parent=63 // loop_pre_header
                _
              $region66: #{tpu_custom_call.1} parent=63 // loop_header
                %s853 = sphi 0, %s855
                %p854 = scmp.ge.s32.totalorder %s853, %s850
                %s858 = sphi 0, %s889
                %s859 = sphi %s829, %s892
                %s860 = sphi %s840, %s893
              $region67: #{tpu_custom_call.1} parent=63 // loop_header_branch
                %857 = sbr.rel (%p854) target = $region71
              $region68: #{tpu_custom_call.1} parent=63 // loop_body
                %v861 = vld [vmem:[%s859] sm:%s849]
                %862 = vst [vmem:[%s860] sm:%s849] %v861
                %v863 = vld [vmem:[%s859 + $0x8] sm:%s849]
                %864 = vst [vmem:[%s860 + $0x8] sm:%s849] %v863
                %v865 = vld [vmem:[%s859 + $0x10] sm:%s849]
                %866 = vst [vmem:[%s860 + $0x10] sm:%s849] %v865
                %v867 = vld [vmem:[%s859 + $0x18] sm:%s849]
                %868 = vst [vmem:[%s860 + $0x18] sm:%s849] %v867
                %v869 = vld [vmem:[%s859 + $0x20] sm:%s849]
                %870 = vst [vmem:[%s860 + $0x20] sm:%s849] %v869
                %v871 = vld [vmem:[%s859 + $0x28] sm:%s849]
                %872 = vst [vmem:[%s860 + $0x28] sm:%s849] %v871
                %v873 = vld [vmem:[%s859 + $0x30] sm:%s849]
                %874 = vst [vmem:[%s860 + $0x30] sm:%s849] %v873
                %v875 = vld [vmem:[%s859 + $0x38] sm:%s849]
                %876 = vst [vmem:[%s860 + $0x38] sm:%s849] %v875
                %v877 = vld [vmem:[%s859 + $0x40] sm:%s849]
                %878 = vst [vmem:[%s860 + $0x40] sm:%s849] %v877
                %v879 = vld [vmem:[%s859 + $0x48] sm:%s849]
                %880 = vst [vmem:[%s860 + $0x48] sm:%s849] %v879
                %v881 = vld [vmem:[%s859 + $0x50] sm:%s849]
                %882 = vst [vmem:[%s860 + $0x50] sm:%s849] %v881
                %v883 = vld [vmem:[%s859 + $0x58] sm:%s849]
                %884 = vst [vmem:[%s860 + $0x58] sm:%s849] %v883
                %v885 = vld [vmem:[%s859 + $0x60] sm:%s849]
                %886 = vst [vmem:[%s860 + $0x60] sm:%s849] %v885
                %s887 = sadd.s32 1, %s858
                %p888 = scmp.ge.s32.totalorder %s887, %s850
                %s889 = scalar_select %p888, 0, %s887
                %s890 = smul.u32 %s889, 104
                %s891 = smul.u32 %s889, 104
                %s892 = scalar_lea.vmem %s829, %s890 [#allocation2]
                %s893 = scalar_lea.vmem %s840, %s891
              $region69: #{tpu_custom_call.1} parent=63 // loop_footer
                %s855 = sadd.s32 %s853, 1
              $region70: #{tpu_custom_call.1} parent=63 // loop_footer_branch
                %852 = sbr.rel target = $region66
              $region71: #{tpu_custom_call.1} parent=63 // loop_exit
                _
              %s894 = sdiv.u32.pop %s836, 13
              %s895 = srem.u32.pop %s836, 13
              %s896 = smul.u32 %s894, 13
              %s897 = smul.u32 8, %s896
              %s898 = scalar_lea.vmem %s829, %s897 [#allocation2]
              %s899 = smul.u32 8, %s896
              %s900 = scalar_lea.vmem %s840, %s899
              // While loop
              $region72: #{tpu_custom_call.1} parent=63 // loop_pre_header
                _
              $region73: #{tpu_custom_call.1} parent=63 // loop_header
                %s902 = sphi 0, %s904
                %p903 = scmp.ge.s32.totalorder %s902, %s895
                %s907 = sphi 0, %s914
                %s908 = sphi %s898, %s917
                %s909 = sphi %s900, %s918
              $region74: #{tpu_custom_call.1} parent=63 // loop_header_branch
                %906 = sbr.rel (%p903) target = $region78
              $region75: #{tpu_custom_call.1} parent=63 // loop_body
                %v910 = vld [vmem:[%s908] sm:%s849]
                %911 = vst [vmem:[%s909] sm:%s849] %v910
                %s912 = sadd.s32 1, %s907
                %p913 = scmp.ge.s32.totalorder %s912, %s895
                %s914 = scalar_select %p913, 0, %s912
                %s915 = smul.u32 %s914, 8
                %s916 = smul.u32 %s914, 8
                %s917 = scalar_lea.vmem %s898, %s915 [#allocation2]
                %s918 = scalar_lea.vmem %s900, %s916
              $region76: #{tpu_custom_call.1} parent=63 // loop_footer
                %s904 = sadd.s32 %s902, 1
              $region77: #{tpu_custom_call.1} parent=63 // loop_footer_branch
                %901 = sbr.rel target = $region73
              $region78: #{tpu_custom_call.1} parent=63 // loop_exit
                _
            $region64: #{tpu_custom_call.1} parent=55 // pred_fallthru
              _
          $region56: #{tpu_custom_call.1} parent=51 // pred_fallthru
            _
          %992 = vnop
        $region52: #{tpu_custom_call.1} parent=47 // pred_fallthru
          _
      $region48: #{tpu_custom_call.1} parent=5 // pred_fallthru
        _
      %p993 = scmp.le.s32.totalorder 2, %s13
      // Predicated region
      $region101: #{tpu_custom_call.1} parent=5 // pred_check
        %p994 = pneg %p993
      $region102: #{tpu_custom_call.1} parent=5 // pred_check_branch
        %996 = sbr.rel (%p994) target = $region104
      $region103: #{tpu_custom_call.1} parent=5 // pred_region
        %s997 = ssub.s32 %s13, 2
        // Predicated region
        $region105: #{tpu_custom_call.1} parent=103 // pred_check
          %p998 = pneg %p194
        $region106: #{tpu_custom_call.1} parent=103 // pred_check_branch
          %1000 = sbr.rel (%p998) target = $region108
        $region107: #{tpu_custom_call.1} parent=103 // pred_region
          %s1001 = sand.u32 %s179, 1
          %s1002 = sand.u32 %s179, 1
          %s1003 = smul.addr %s1002, 104
          %s1004 = scalar_lea.vmem [#allocation2], %s1003
        $region108: #{tpu_custom_call.1} parent=103 // pred_fallthru
          _
      $region104: #{tpu_custom_call.1} parent=5 // pred_fallthru
        _
    $region6: #{tpu_custom_call.1} parent=1 // loop_footer
      %s17 = sadd.s32 1, %s13
    $region7: #{tpu_custom_call.1} parent=1 // loop_footer_branch
      %12 = sbr.rel target = $region3
    $region8: #{tpu_custom_call.1} parent=1 // loop_exit
      _

</llo_original>
